<compile_context>
chip_gen: v7x
topology: tpu7x:2x2x1
jax: 0.10.0
libtpu: 0.0.40
codegen_flags: <defaults>
</compile_context>

<pallas_src>
import math

import jax
import jax.numpy as jnp
from jax import lax
from jax.experimental import pallas as pl
from jax.experimental.pallas import tpu as pltpu

# ---- module hyper-parameters (PANTHERBase defaults, d kept small) ----
P = 5          # number of prototypes
D = 32         # feature dimension
L_ITERS = 3    # number of EM iterations
TAU = 10.0     # MAP regularizer
OT_EPS = 0.1   # prior covariance scale (ot_eps)


# --------------------------------------------------------------------------
# kernel
# --------------------------------------------------------------------------
def _make_kernel(p, d, n, block_b, use_loop):
    const = d * math.log(2.0 * math.pi)

    def em_one(x_t, mrow, m, V, prior_cat):
        # x_t: (d, N) tokens-on-lanes, mrow: (1, N), prior_cat: (p, 2d)
        xsq_t = x_t * x_t
        xcat = jnp.concatenate([x_t, xsq_t], axis=0)          # (2d, N) sublane-aligned
        pi_col = jnp.full((p, 1), 1.0 / p, dtype=jnp.float32)
        mu = m                                                 # (p, d)
        Sigma = V                                              # (p, d)
        qq = jnp.zeros((p, n), dtype=jnp.float32)

        for _ in range(L_ITERS):
            # ---------------- E-step (mog_eval), (p, N) lane-dense ----------
            inv_S = 1.0 / Sigma                                          # (p, d)
            logdet = jnp.sum(jnp.log(Sigma), axis=-1, keepdims=True)     # (p, 1)
            mahal = jnp.sum(mu * mu * inv_S, axis=-1, keepdims=True)     # (p, 1)
            bias = jnp.log(pi_col) - 0.5 * (const + logdet + mahal)      # (p, 1)
            t2 = lax.dot_general(mu * inv_S, x_t, (((1,), (0,)), ((), ())),
                                 preferred_element_type=jnp.float32)     # (p, N)
            t1 = lax.dot_general(inv_S, xsq_t, (((1,), (0,)), ((), ())),
                                 preferred_element_type=jnp.float32)     # (p, N)
            jll = (t2 - 0.5 * t1) + bias                                  # (p, N)
            # fused softmax over prototypes (sublane reduce), single exp
            mx = jnp.max(jll, axis=0, keepdims=True)                      # (1, N)
            e = jnp.exp(jll - mx)                                         # (p, N)
            ssum = jnp.sum(e, axis=0, keepdims=True)                      # (1, N)
            qq = e * (mrow * (1.0 / ssum))                                # (p, N)

            # ---------------- M-step (map_m_step), fused matmul -------------
            # qq (p, N) x xcat (2d, N)^T -> (p, 2d) = [wxsum | wxxsum]
            wcat = lax.dot_general(qq, xcat, (((1,), (1,)), ((), ())),
                                   preferred_element_type=jnp.float32)
            wsum = jnp.sum(qq, axis=-1, keepdims=True)                    # (p, 1)
            wreg = wsum + TAU
            wreg_total = jnp.sum(wreg, axis=0, keepdims=True)             # (1, 1)
            pi_col = wreg * (1.0 / wreg_total)
            stat = (wcat + prior_cat) * (1.0 / wreg)                      # (p, 2d)
            mu = stat[:, :d]
            Sigma = stat[:, d:] - mu * mu

        return pi_col, mu, Sigma, qq

    def kernel(prior_ref, s_ref, mask_ref, stats_ref, qq_ref):
        mV = prior_ref[0]            # (p, 2d) = [m | V]
        prior_cat = prior_ref[1]     # (p, 2d) = [m, V + m^2] * tau
        m = mV[:, :d]
        V = mV[:, d:]

        def do_sample(b):
            pi_col, mu, Sigma, qq = em_one(s_ref[b], mask_ref[b], m, V, prior_cat)
            stats_ref[b, 0] = jnp.broadcast_to(pi_col, (p, d))
            stats_ref[b, 1] = mu
            stats_ref[b, 2] = Sigma
            qq_ref[b] = qq           # (p, N) lane-dense store

        if use_loop:
            # dynamic loop keeps (·, N) temporaries' live ranges bounded
            @pl.loop(0, block_b)
            def _(b):
                do_sample(b)
        else:
            for b in range(block_b):
                do_sample(b)

    return kernel


# --------------------------------------------------------------------------
# VMEM-aware tiling
# --------------------------------------------------------------------------
def _vmem_capacity_bytes():
    try:
        info = pltpu.get_tpu_info()
        cap = getattr(info, "vmem_capacity_bytes", None)
        if cap:
            return int(cap)
    except Exception:
        pass
    return 64 << 20  # conservative default (v7x per-core VMEM)


def _per_sample_vmem_bytes(n, d, p):
    f = 4
    p_pad = ((p + 7) // 8) * 8
    n_pad = ((n + 127) // 128) * 128
    s_in = 2 * d * n_pad * f         # double-buffered S block
    mask_in = 2 * 8 * n_pad * f      # double-buffered mask block (1 row -> 8 sublanes)
    qq_out = 2 * p_pad * n_pad * f   # double-buffered qq output block
    xcat = 2 * d * n_pad * f         # in-kernel [x ; x^2] buffer
    temps = 4 * p_pad * n_pad * f    # jll / e / qq temporaries + slack
    return s_in + mask_in + qq_out + xcat + temps


def _choose_block_b(B, n, d, p, vmem_cap):
    per = _per_sample_vmem_bytes(n, d, p)
    budget = int(0.5 * vmem_cap)
    max_bb = max(1, budget // per)
    divisors = [x for x in range(1, B + 1) if B % x == 0 and x <= max_bb]
    if not divisors:
        divisors = [1]
    # prefer an even number of grid steps (v7x two-TensorCore balance)
    even_steps = [x for x in divisors if (B // x) % 2 == 0]
    pool = even_steps if even_steps else divisors
    return max(pool)


# --------------------------------------------------------------------------
# wrapper
# --------------------------------------------------------------------------
def panther_forward(S, mask=None, m=None, V_=None, block_b=None):
    """PANTHERBase.forward with out='allcat'. Returns (out, qqs)."""
    S = S.astype(jnp.float32)
    B, N, d = S.shape
    p = m.shape[0]
    if mask is None:
        mask = jnp.ones((B, N), dtype=jnp.float32)

    # DirNIWNet.forward(): V = eps * softplus(V_)   (tiny parameter glue in XLA)
    m = m.astype(jnp.float32)
    V = (OT_EPS * jax.nn.softplus(V_)).astype(jnp.float32)
    # packed prior: row 0 = [m | V], row 1 = [m, V + m^2] * tau  -> (2, p, 2d)
    prior_pack = jnp.stack(
        [jnp.concatenate([m, V], axis=1),
         jnp.concatenate([m, V + m * m], axis=1) * TAU], axis=0)

    # tokens on the lane axis: (B, d, N); lane-major mask (B, 1, N)
    # TODO(synk): if the producer of S can emit (B, d, N) directly, drop this transpose.
    S_t = jnp.swapaxes(S, 1, 2)
    mask_row = mask.reshape(B, 1, N).astype(jnp.float32)

    vmem_cap = _vmem_capacity_bytes()
    if block_b is None:
        block_b = _choose_block_b(B, N, d, p, vmem_cap)
    assert B % block_b == 0
    grid = (B // block_b,)
    use_loop = (block_b > 8) or (block_b > 2 and N >= 1024)

    kernel = _make_kernel(p, d, N, block_b, use_loop)

    out_shapes = (
        jax.ShapeDtypeStruct((B, 3, p, d), jnp.float32),   # [pi | mu | Sigma]
        jax.ShapeDtypeStruct((B, p, N), jnp.float32),      # qq (lane-dense)
    )
    grid_spec = pltpu.PrefetchScalarGridSpec(
        num_scalar_prefetch=0,
        grid=grid,
        in_specs=[
            pl.BlockSpec((2, p, 2 * d), lambda b: (0, 0, 0)),     # packed prior
            pl.BlockSpec((block_b, d, N), lambda b: (b, 0, 0)),   # S, (d, N) tiles
            pl.BlockSpec((block_b, 1, N), lambda b: (b, 0, 0)),   # mask rows
        ],
        out_specs=[
            pl.BlockSpec((block_b, 3, p, d), lambda b: (b, 0, 0, 0)),
            pl.BlockSpec((block_b, p, N), lambda b: (b, 0, 0)),
        ],
    )

    # Raise the scoped VMEM limit only when the blocked tiles need it; stay
    # well inside this chip's physical VMEM.
    need = block_b * _per_sample_vmem_bytes(N, d, p) + (1 << 20)
    cp_kwargs = dict(dimension_semantics=("parallel",))
    if 2 * need > (16 << 20):
        cp_kwargs["vmem_limit_bytes"] = int(min(0.85 * vmem_cap,
                                                max(2 * need, 32 << 20)))
    compiler_params = pltpu.CompilerParams(**cp_kwargs)

    stats, qq_pn = pl.pallas_call(
        kernel,
        out_shape=out_shapes,
        grid_spec=grid_spec,
        compiler_params=compiler_params,
    )(prior_pack, S_t, mask_row)

    pi = stats[:, 0, :, 0]                               # (B, p)
    mu = stats[:, 1].reshape(B, -1)                      # (B, p*d)
    Sigma = stats[:, 2].reshape(B, -1)                   # (B, p*d)
    out = jnp.concatenate([pi, mu, Sigma], axis=1)       # (B, p + 2*p*d)
    # Module contract returns qq as (B, N, p, 1).
    # TODO(synk): keep qq as (B, p, N) if the downstream consumer allows it,
    # avoiding this full HBM relayout of the largest kernel output.
    qqs = jnp.transpose(qq_pn, (0, 2, 1))[..., None]
    return out, qqs


# --------------------------------------------------------------------------
# pure-JAX reference (mirrors the PyTorch module) for validation
# --------------------------------------------------------------------------
def ref_forward(S, mask, m, V_):
    B, N, d = S.shape
    p = m.shape[0]
    V = OT_EPS * jax.nn.softplus(V_)
    pi = jnp.full((B, p), 1.0 / p, dtype=jnp.float32)
    mu = jnp.broadcast_to(m, (B, p, d)).astype(jnp.float32)
    Sigma = jnp.broadcast_to(V, (B, p, d)).astype(jnp.float32)
    qq = None
    for _ in range(L_ITERS):
        inv_S = 1.0 / Sigma
        jll = (-0.5 * (d * jnp.log(2.0 * jnp.pi)
                       + jnp.sum(jnp.log(Sigma), -1)[:, None, :]
                       + jnp.einsum('bnd,bpd->bnp', S ** 2, inv_S)
                       + jnp.sum(mu ** 2 * inv_S, -1)[:, None, :]
                       - 2.0 * jnp.einsum('bnd,bpd->bnp', S, mu * inv_S))
               + jnp.log(pi)[:, None, :])
        mll = jax.scipy.special.logsumexp(jll, axis=-1)
        qq = jnp.exp(jll - mll[..., None]) * mask[..., None]
        wsum = qq.sum(1)
        wreg = wsum + TAU
        wxsum = jnp.einsum('bnp,bnd->bpd', qq, S)
        wxxsum = jnp.einsum('bnp,bnd->bpd', qq, S ** 2)
        pi = wreg / wreg.sum(1, keepdims=True)
        mu = (wxsum + m[None] * TAU) / wreg[..., None]
        Sigma = (wxxsum + (V + m ** 2)[None] * TAU) / wreg[..., None] - mu ** 2
    out = jnp.concatenate([pi, mu.reshape(B, -1), Sigma.reshape(B, -1)], axis=1)
    return out, qq[..., None]


if __name__ == "__main__":
    B, N = 2, 8
    key = jax.random.PRNGKey(0)
    k_s, k_m = jax.random.split(key)

    S = jax.random.normal(k_s, (B, N, D), dtype=jnp.float32)
    mask = jnp.ones((B, N), dtype=jnp.float32)
    mask = mask.at[1, 6:].set(0.0)      # exercise the token-mask path
    # DirNIWNet params (load_proto=False path, deterministic init)
    m_param = 0.1 * jax.random.normal(k_m, (P, D), dtype=jnp.float32)
    V_param = jnp.full((P, D), math.log(math.e - 1.0), dtype=jnp.float32)

    out, qqs = panther_forward(S, mask, m_param, V_param)
    jax.block_until_ready(out)
    jax.block_until_ready(qqs)

    out_ref, qqs_ref = ref_forward(S, mask, m_param, V_param)
    assert out.shape == (B, P + 2 * P * D)
    assert qqs.shape == (B, N, P, 1)
    assert jnp.allclose(out, out_ref, rtol=1e-4, atol=1e-4)
    assert jnp.allclose(qqs, qqs_ref, rtol=1e-4, atol=1e-4)

    print("KERNEL_OK")
</pallas_src>

<mosaic_0001>
module attributes {stable_mosaic.version = 11 : i64} {
  func.func @kernel(%arg0: i32, %arg1: memref<2x5x64xf32, #tpu.memory_space<vmem>>, %arg2: memref<1x32x8xf32, #tpu.memory_space<vmem>>, %arg3: memref<1x1x8xf32, #tpu.memory_space<vmem>>, %arg4: memref<1x3x5x32xf32, #tpu.memory_space<vmem>>, %arg5: memref<1x5x8xf32, #tpu.memory_space<vmem>>) attributes {dimension_semantics = [#tpu.dimension_semantics<parallel>], iteration_bounds = array<i64: 2>, scalar_prefetch = 0 : i64, scratch_operands = 0 : i64, tpu.core_type = #tpu.core_type<tc>, window_params = [{pipeline_mode = #tpu.pipeline_mode<synchronous>, transform_indices = @transform_0, window_bounds = array<i64: 2, 5, 64>}, {transform_indices = @transform_1, window_bounds = array<i64: 1, 32, 8>}, {transform_indices = @transform_2, window_bounds = array<i64: 1, 1, 8>}, {transform_indices = @transform_3, window_bounds = array<i64: 1, 3, 5, 32>}, {transform_indices = @transform_4, window_bounds = array<i64: 1, 5, 8>}]} {
    %c0 = arith.constant 0 : index
    %c0_0 = arith.constant 0 : index
    %c0_1 = arith.constant 0 : index
    %0 = vector.load %arg1[%c0, %c0_0, %c0_1] : memref<2x5x64xf32, #tpu.memory_space<vmem>>, vector<1x5x64xf32>
    %1 = vector.shape_cast %0 : vector<1x5x64xf32> to vector<5x64xf32>
    %c1 = arith.constant 1 : index
    %c0_2 = arith.constant 0 : index
    %c0_3 = arith.constant 0 : index
    %2 = vector.load %arg1[%c1, %c0_2, %c0_3] : memref<2x5x64xf32, #tpu.memory_space<vmem>>, vector<1x5x64xf32>
    %3 = vector.shape_cast %2 : vector<1x5x64xf32> to vector<5x64xf32>
    %4 = vector.extract_strided_slice %1 {offsets = [0, 0], sizes = [5, 32], strides = [1, 1]} : vector<5x64xf32> to vector<5x32xf32>
    %5 = vector.extract_strided_slice %1 {offsets = [0, 32], sizes = [5, 32], strides = [1, 1]} : vector<5x64xf32> to vector<5x32xf32>
    %c0_4 = arith.constant 0 : index
    %c0_5 = arith.constant 0 : index
    %c0_6 = arith.constant 0 : index
    %6 = vector.load %arg2[%c0_4, %c0_5, %c0_6] : memref<1x32x8xf32, #tpu.memory_space<vmem>>, vector<1x32x8xf32>
    %7 = vector.shape_cast %6 : vector<1x32x8xf32> to vector<32x8xf32>
    %c0_7 = arith.constant 0 : index
    %c0_8 = arith.constant 0 : index
    %c0_9 = arith.constant 0 : index
    %8 = vector.load %arg3[%c0_7, %c0_8, %c0_9] : memref<1x1x8xf32, #tpu.memory_space<vmem>>, vector<1x1x8xf32>
    %9 = vector.shape_cast %8 : vector<1x1x8xf32> to vector<1x8xf32>
    %10 = arith.mulf %7, %7 : vector<32x8xf32>
    %11 = tpu.concatenate %7, %10 in 0 : vector<32x8xf32>, vector<32x8xf32> -> vector<64x8xf32>
    %cst = arith.constant 2.000000e-01 : f32
    %12 = vector.broadcast %cst : f32 to vector<5x1xf32>
    %cst_10 = arith.constant 1.000000e+00 : f32
    %13 = vector.broadcast %cst_10 : f32 to vector<5x32xf32>
    %14 = arith.divf %13, %5 : vector<5x32xf32>
    %15 = math.log %5 : vector<5x32xf32>
    %cst_11 = arith.constant dense<0.000000e+00> : vector<5xf32>
    %16 = vector.multi_reduction <add>, %15, %cst_11 [1] : vector<5x32xf32> to vector<5xf32>
    %17 = vector.shape_cast %16 : vector<5xf32> to vector<5x1xf32>
    %18 = arith.mulf %4, %4 : vector<5x32xf32>
    %19 = arith.mulf %18, %14 : vector<5x32xf32>
    %cst_12 = arith.constant dense<0.000000e+00> : vector<5xf32>
    %20 = vector.multi_reduction <add>, %19, %cst_12 [1] : vector<5x32xf32> to vector<5xf32>
    %21 = vector.shape_cast %20 : vector<5xf32> to vector<5x1xf32>
    %22 = math.log %12 : vector<5x1xf32>
    %cst_13 = arith.constant 58.8120651 : f32
    %23 = vector.broadcast %cst_13 : f32 to vector<5x1xf32>
    %24 = arith.addf %23, %17 : vector<5x1xf32>
    %25 = arith.addf %24, %21 : vector<5x1xf32>
    %cst_14 = arith.constant 5.000000e-01 : f32
    %26 = vector.broadcast %cst_14 : f32 to vector<5x1xf32>
    %27 = arith.mulf %26, %25 : vector<5x1xf32>
    %28 = arith.subf %22, %27 : vector<5x1xf32>
    %29 = arith.mulf %4, %14 : vector<5x32xf32>
    %cst_15 = arith.constant dense<0.000000e+00> : vector<5x8xf32>
    %30 = tpu.matmul %29, %7, %cst_15 {dimension_numbers = #tpu.dot_dimension_numbers<[1], [0], [0], [1], [0, 0, 1, 1], [], []>} : vector<5x32xf32>, vector<32x8xf32>, vector<5x8xf32> -> vector<5x8xf32>
    %cst_16 = arith.constant dense<0.000000e+00> : vector<5x8xf32>
    %31 = tpu.matmul %14, %10, %cst_16 {dimension_numbers = #tpu.dot_dimension_numbers<[1], [0], [0], [1], [0, 0, 1, 1], [], []>} : vector<5x32xf32>, vector<32x8xf32>, vector<5x8xf32> -> vector<5x8xf32>
    %cst_17 = arith.constant 5.000000e-01 : f32
    %32 = vector.broadcast %cst_17 : f32 to vector<5x8xf32>
    %33 = arith.mulf %32, %31 : vector<5x8xf32>
    %34 = arith.subf %30, %33 : vector<5x8xf32>
    %35 = vector.broadcast %28 : vector<5x1xf32> to vector<5x8xf32>
    %36 = arith.addf %34, %35 : vector<5x8xf32>
    %cst_18 = arith.constant dense<0xFF800000> : vector<8xf32>
    %37 = vector.multi_reduction <maximumf>, %36, %cst_18 [0] : vector<5x8xf32> to vector<8xf32>
    %38 = vector.shape_cast %37 : vector<8xf32> to vector<1x8xf32>
    %39 = vector.broadcast %38 : vector<1x8xf32> to vector<5x8xf32>
    %40 = arith.subf %36, %39 : vector<5x8xf32>
    %41 = math.exp %40 : vector<5x8xf32>
    %cst_19 = arith.constant dense<0.000000e+00> : vector<8xf32>
    %42 = vector.multi_reduction <add>, %41, %cst_19 [0] : vector<5x8xf32> to vector<8xf32>
    %43 = vector.shape_cast %42 : vector<8xf32> to vector<1x8xf32>
    %cst_20 = arith.constant 1.000000e+00 : f32
    %44 = vector.broadcast %cst_20 : f32 to vector<1x8xf32>
    %45 = arith.divf %44, %43 : vector<1x8xf32>
    %46 = arith.mulf %9, %45 : vector<1x8xf32>
    %47 = vector.broadcast %46 : vector<1x8xf32> to vector<5x8xf32>
    %48 = arith.mulf %41, %47 : vector<5x8xf32>
    %cst_21 = arith.constant dense<0.000000e+00> : vector<5x64xf32>
    %49 = tpu.matmul %48, %11, %cst_21 {dimension_numbers = #tpu.dot_dimension_numbers<[1], [1], [0], [0], [0, 0, 1, 0], [], []>} : vector<5x8xf32>, vector<64x8xf32>, vector<5x64xf32> -> vector<5x64xf32>
    %cst_22 = arith.constant dense<0.000000e+00> : vector<5xf32>
    %50 = vector.multi_reduction <add>, %48, %cst_22 [1] : vector<5x8xf32> to vector<5xf32>
    %51 = vector.shape_cast %50 : vector<5xf32> to vector<5x1xf32>
    %cst_23 = arith.constant 1.000000e+01 : f32
    %52 = vector.broadcast %cst_23 : f32 to vector<5x1xf32>
    %53 = arith.addf %51, %52 : vector<5x1xf32>
    %cst_24 = arith.constant dense<0.000000e+00> : vector<1xf32>
    %54 = vector.multi_reduction <add>, %53, %cst_24 [0] : vector<5x1xf32> to vector<1xf32>
    %55 = vector.shape_cast %54 : vector<1xf32> to vector<1x1xf32>
    %cst_25 = arith.constant 1.000000e+00 : f32
    %56 = vector.broadcast %cst_25 : f32 to vector<1x1xf32>
    %57 = arith.divf %56, %55 : vector<1x1xf32>
    %58 = vector.broadcast %57 : vector<1x1xf32> to vector<5x1xf32>
    %59 = arith.mulf %53, %58 : vector<5x1xf32>
    %60 = arith.addf %49, %3 : vector<5x64xf32>
    %cst_26 = arith.constant 1.000000e+00 : f32
    %61 = vector.broadcast %cst_26 : f32 to vector<5x1xf32>
    %62 = arith.divf %61, %53 : vector<5x1xf32>
    %63 = vector.broadcast %62 : vector<5x1xf32> to vector<5x64xf32>
    %64 = arith.mulf %60, %63 : vector<5x64xf32>
    %65 = vector.extract_strided_slice %64 {offsets = [0, 0], sizes = [5, 32], strides = [1, 1]} : vector<5x64xf32> to vector<5x32xf32>
    %66 = vector.extract_strided_slice %64 {offsets = [0, 32], sizes = [5, 32], strides = [1, 1]} : vector<5x64xf32> to vector<5x32xf32>
    %67 = arith.mulf %65, %65 : vector<5x32xf32>
    %68 = arith.subf %66, %67 : vector<5x32xf32>
    %cst_27 = arith.constant 1.000000e+00 : f32
    %69 = vector.broadcast %cst_27 : f32 to vector<5x32xf32>
    %70 = arith.divf %69, %68 : vector<5x32xf32>
    %71 = math.log %68 : vector<5x32xf32>
    %cst_28 = arith.constant dense<0.000000e+00> : vector<5xf32>
    %72 = vector.multi_reduction <add>, %71, %cst_28 [1] : vector<5x32xf32> to vector<5xf32>
    %73 = vector.shape_cast %72 : vector<5xf32> to vector<5x1xf32>
    %74 = arith.mulf %65, %65 : vector<5x32xf32>
    %75 = arith.mulf %74, %70 : vector<5x32xf32>
    %cst_29 = arith.constant dense<0.000000e+00> : vector<5xf32>
    %76 = vector.multi_reduction <add>, %75, %cst_29 [1] : vector<5x32xf32> to vector<5xf32>
    %77 = vector.shape_cast %76 : vector<5xf32> to vector<5x1xf32>
    %78 = math.log %59 : vector<5x1xf32>
    %cst_30 = arith.constant 58.8120651 : f32
    %79 = vector.broadcast %cst_30 : f32 to vector<5x1xf32>
    %80 = arith.addf %79, %73 : vector<5x1xf32>
    %81 = arith.addf %80, %77 : vector<5x1xf32>
    %cst_31 = arith.constant 5.000000e-01 : f32
    %82 = vector.broadcast %cst_31 : f32 to vector<5x1xf32>
    %83 = arith.mulf %82, %81 : vector<5x1xf32>
    %84 = arith.subf %78, %83 : vector<5x1xf32>
    %85 = arith.mulf %65, %70 : vector<5x32xf32>
    %cst_32 = arith.constant dense<0.000000e+00> : vector<5x8xf32>
    %86 = tpu.matmul %85, %7, %cst_32 {dimension_numbers = #tpu.dot_dimension_numbers<[1], [0], [0], [1], [0, 0, 1, 1], [], []>} : vector<5x32xf32>, vector<32x8xf32>, vector<5x8xf32> -> vector<5x8xf32>
    %cst_33 = arith.constant dense<0.000000e+00> : vector<5x8xf32>
    %87 = tpu.matmul %70, %10, %cst_33 {dimension_numbers = #tpu.dot_dimension_numbers<[1], [0], [0], [1], [0, 0, 1, 1], [], []>} : vector<5x32xf32>, vector<32x8xf32>, vector<5x8xf32> -> vector<5x8xf32>
    %cst_34 = arith.constant 5.000000e-01 : f32
    %88 = vector.broadcast %cst_34 : f32 to vector<5x8xf32>
    %89 = arith.mulf %88, %87 : vector<5x8xf32>
    %90 = arith.subf %86, %89 : vector<5x8xf32>
    %91 = vector.broadcast %84 : vector<5x1xf32> to vector<5x8xf32>
    %92 = arith.addf %90, %91 : vector<5x8xf32>
    %cst_35 = arith.constant dense<0xFF800000> : vector<8xf32>
    %93 = vector.multi_reduction <maximumf>, %92, %cst_35 [0] : vector<5x8xf32> to vector<8xf32>
    %94 = vector.shape_cast %93 : vector<8xf32> to vector<1x8xf32>
    %95 = vector.broadcast %94 : vector<1x8xf32> to vector<5x8xf32>
    %96 = arith.subf %92, %95 : vector<5x8xf32>
    %97 = math.exp %96 : vector<5x8xf32>
    %cst_36 = arith.constant dense<0.000000e+00> : vector<8xf32>
    %98 = vector.multi_reduction <add>, %97, %cst_36 [0] : vector<5x8xf32> to vector<8xf32>
    %99 = vector.shape_cast %98 : vector<8xf32> to vector<1x8xf32>
    %cst_37 = arith.constant 1.000000e+00 : f32
    %100 = vector.broadcast %cst_37 : f32 to vector<1x8xf32>
    %101 = arith.divf %100, %99 : vector<1x8xf32>
    %102 = arith.mulf %9, %101 : vector<1x8xf32>
    %103 = vector.broadcast %102 : vector<1x8xf32> to vector<5x8xf32>
    %104 = arith.mulf %97, %103 : vector<5x8xf32>
    %cst_38 = arith.constant dense<0.000000e+00> : vector<5x64xf32>
    %105 = tpu.matmul %104, %11, %cst_38 {dimension_numbers = #tpu.dot_dimension_numbers<[1], [1], [0], [0], [0, 0, 1, 0], [], []>} : vector<5x8xf32>, vector<64x8xf32>, vector<5x64xf32> -> vector<5x64xf32>
    %cst_39 = arith.constant dense<0.000000e+00> : vector<5xf32>
    %106 = vector.multi_reduction <add>, %104, %cst_39 [1] : vector<5x8xf32> to vector<5xf32>
    %107 = vector.shape_cast %106 : vector<5xf32> to vector<5x1xf32>
    %cst_40 = arith.constant 1.000000e+01 : f32
    %108 = vector.broadcast %cst_40 : f32 to vector<5x1xf32>
    %109 = arith.addf %107, %108 : vector<5x1xf32>
    %cst_41 = arith.constant dense<0.000000e+00> : vector<1xf32>
    %110 = vector.multi_reduction <add>, %109, %cst_41 [0] : vector<5x1xf32> to vector<1xf32>
    %111 = vector.shape_cast %110 : vector<1xf32> to vector<1x1xf32>
    %cst_42 = arith.constant 1.000000e+00 : f32
    %112 = vector.broadcast %cst_42 : f32 to vector<1x1xf32>
    %113 = arith.divf %112, %111 : vector<1x1xf32>
    %114 = vector.broadcast %113 : vector<1x1xf32> to vector<5x1xf32>
    %115 = arith.mulf %109, %114 : vector<5x1xf32>
    %116 = arith.addf %105, %3 : vector<5x64xf32>
    %cst_43 = arith.constant 1.000000e+00 : f32
    %117 = vector.broadcast %cst_43 : f32 to vector<5x1xf32>
    %118 = arith.divf %117, %109 : vector<5x1xf32>
    %119 = vector.broadcast %118 : vector<5x1xf32> to vector<5x64xf32>
    %120 = arith.mulf %116, %119 : vector<5x64xf32>
    %121 = vector.extract_strided_slice %120 {offsets = [0, 0], sizes = [5, 32], strides = [1, 1]} : vector<5x64xf32> to vector<5x32xf32>
    %122 = vector.extract_strided_slice %120 {offsets = [0, 32], sizes = [5, 32], strides = [1, 1]} : vector<5x64xf32> to vector<5x32xf32>
    %123 = arith.mulf %121, %121 : vector<5x32xf32>
    %124 = arith.subf %122, %123 : vector<5x32xf32>
    %cst_44 = arith.constant 1.000000e+00 : f32
    %125 = vector.broadcast %cst_44 : f32 to vector<5x32xf32>
    %126 = arith.divf %125, %124 : vector<5x32xf32>
    %127 = math.log %124 : vector<5x32xf32>
    %cst_45 = arith.constant dense<0.000000e+00> : vector<5xf32>
    %128 = vector.multi_reduction <add>, %127, %cst_45 [1] : vector<5x32xf32> to vector<5xf32>
    %129 = vector.shape_cast %128 : vector<5xf32> to vector<5x1xf32>
    %130 = arith.mulf %121, %121 : vector<5x32xf32>
    %131 = arith.mulf %130, %126 : vector<5x32xf32>
    %cst_46 = arith.constant dense<0.000000e+00> : vector<5xf32>
    %132 = vector.multi_reduction <add>, %131, %cst_46 [1] : vector<5x32xf32> to vector<5xf32>
    %133 = vector.shape_cast %132 : vector<5xf32> to vector<5x1xf32>
    %134 = math.log %115 : vector<5x1xf32>
    %cst_47 = arith.constant 58.8120651 : f32
    %135 = vector.broadcast %cst_47 : f32 to vector<5x1xf32>
    %136 = arith.addf %135, %129 : vector<5x1xf32>
    %137 = arith.addf %136, %133 : vector<5x1xf32>
    %cst_48 = arith.constant 5.000000e-01 : f32
    %138 = vector.broadcast %cst_48 : f32 to vector<5x1xf32>
    %139 = arith.mulf %138, %137 : vector<5x1xf32>
    %140 = arith.subf %134, %139 : vector<5x1xf32>
    %141 = arith.mulf %121, %126 : vector<5x32xf32>
    %cst_49 = arith.constant dense<0.000000e+00> : vector<5x8xf32>
    %142 = tpu.matmul %141, %7, %cst_49 {dimension_numbers = #tpu.dot_dimension_numbers<[1], [0], [0], [1], [0, 0, 1, 1], [], []>} : vector<5x32xf32>, vector<32x8xf32>, vector<5x8xf32> -> vector<5x8xf32>
    %cst_50 = arith.constant dense<0.000000e+00> : vector<5x8xf32>
    %143 = tpu.matmul %126, %10, %cst_50 {dimension_numbers = #tpu.dot_dimension_numbers<[1], [0], [0], [1], [0, 0, 1, 1], [], []>} : vector<5x32xf32>, vector<32x8xf32>, vector<5x8xf32> -> vector<5x8xf32>
    %cst_51 = arith.constant 5.000000e-01 : f32
    %144 = vector.broadcast %cst_51 : f32 to vector<5x8xf32>
    %145 = arith.mulf %144, %143 : vector<5x8xf32>
    %146 = arith.subf %142, %145 : vector<5x8xf32>
    %147 = vector.broadcast %140 : vector<5x1xf32> to vector<5x8xf32>
    %148 = arith.addf %146, %147 : vector<5x8xf32>
    %cst_52 = arith.constant dense<0xFF800000> : vector<8xf32>
    %149 = vector.multi_reduction <maximumf>, %148, %cst_52 [0] : vector<5x8xf32> to vector<8xf32>
    %150 = vector.shape_cast %149 : vector<8xf32> to vector<1x8xf32>
    %151 = vector.broadcast %150 : vector<1x8xf32> to vector<5x8xf32>
    %152 = arith.subf %148, %151 : vector<5x8xf32>
    %153 = math.exp %152 : vector<5x8xf32>
    %cst_53 = arith.constant dense<0.000000e+00> : vector<8xf32>
    %154 = vector.multi_reduction <add>, %153, %cst_53 [0] : vector<5x8xf32> to vector<8xf32>
    %155 = vector.shape_cast %154 : vector<8xf32> to vector<1x8xf32>
    %cst_54 = arith.constant 1.000000e+00 : f32
    %156 = vector.broadcast %cst_54 : f32 to vector<1x8xf32>
    %157 = arith.divf %156, %155 : vector<1x8xf32>
    %158 = arith.mulf %9, %157 : vector<1x8xf32>
    %159 = vector.broadcast %158 : vector<1x8xf32> to vector<5x8xf32>
    %160 = arith.mulf %153, %159 : vector<5x8xf32>
    %cst_55 = arith.constant dense<0.000000e+00> : vector<5x64xf32>
    %161 = tpu.matmul %160, %11, %cst_55 {dimension_numbers = #tpu.dot_dimension_numbers<[1], [1], [0], [0], [0, 0, 1, 0], [], []>} : vector<5x8xf32>, vector<64x8xf32>, vector<5x64xf32> -> vector<5x64xf32>
    %cst_56 = arith.constant dense<0.000000e+00> : vector<5xf32>
    %162 = vector.multi_reduction <add>, %160, %cst_56 [1] : vector<5x8xf32> to vector<5xf32>
    %163 = vector.shape_cast %162 : vector<5xf32> to vector<5x1xf32>
    %cst_57 = arith.constant 1.000000e+01 : f32
    %164 = vector.broadcast %cst_57 : f32 to vector<5x1xf32>
    %165 = arith.addf %163, %164 : vector<5x1xf32>
    %cst_58 = arith.constant dense<0.000000e+00> : vector<1xf32>
    %166 = vector.multi_reduction <add>, %165, %cst_58 [0] : vector<5x1xf32> to vector<1xf32>
    %167 = vector.shape_cast %166 : vector<1xf32> to vector<1x1xf32>
    %cst_59 = arith.constant 1.000000e+00 : f32
    %168 = vector.broadcast %cst_59 : f32 to vector<1x1xf32>
    %169 = arith.divf %168, %167 : vector<1x1xf32>
    %170 = vector.broadcast %169 : vector<1x1xf32> to vector<5x1xf32>
    %171 = arith.mulf %165, %170 : vector<5x1xf32>
    %172 = arith.addf %161, %3 : vector<5x64xf32>
    %cst_60 = arith.constant 1.000000e+00 : f32
    %173 = vector.broadcast %cst_60 : f32 to vector<5x1xf32>
    %174 = arith.divf %173, %165 : vector<5x1xf32>
    %175 = vector.broadcast %174 : vector<5x1xf32> to vector<5x64xf32>
    %176 = arith.mulf %172, %175 : vector<5x64xf32>
    %177 = vector.extract_strided_slice %176 {offsets = [0, 0], sizes = [5, 32], strides = [1, 1]} : vector<5x64xf32> to vector<5x32xf32>
    %178 = vector.extract_strided_slice %176 {offsets = [0, 32], sizes = [5, 32], strides = [1, 1]} : vector<5x64xf32> to vector<5x32xf32>
    %179 = arith.mulf %177, %177 : vector<5x32xf32>
    %180 = arith.subf %178, %179 : vector<5x32xf32>
    %181 = vector.shape_cast %171 : vector<5x1xf32> to vector<5x1xf32>
    %182 = vector.broadcast %181 : vector<5x1xf32> to vector<5x32xf32>
    %c0_61 = arith.constant 0 : index
    %c0_62 = arith.constant 0 : index
    %c0_63 = arith.constant 0 : index
    %c0_64 = arith.constant 0 : index
    %183 = vector.load %arg4[%c0_61, %c0_62, %c0_63, %c0_64] : memref<1x3x5x32xf32, #tpu.memory_space<vmem>>, vector<1x1x5x32xf32>
    %184 = vector.shape_cast %183 : vector<1x1x5x32xf32> to vector<5x32xf32>
    %185 = vector.shape_cast %182 : vector<5x32xf32> to vector<1x1x5x32xf32>
    tpu.vector_store %arg4[%c0_61, %c0_62, %c0_63, %c0_64], %185 {strides = array<i32>} : memref<1x3x5x32xf32, #tpu.memory_space<vmem>>, vector<1x1x5x32xf32>,
    %c0_65 = arith.constant 0 : index
    %c1_66 = arith.constant 1 : index
    %c0_67 = arith.constant 0 : index
    %c0_68 = arith.constant 0 : index
    %186 = vector.load %arg4[%c0_65, %c1_66, %c0_67, %c0_68] : memref<1x3x5x32xf32, #tpu.memory_space<vmem>>, vector<1x1x5x32xf32>
    %187 = vector.shape_cast %186 : vector<1x1x5x32xf32> to vector<5x32xf32>
    %188 = vector.shape_cast %177 : vector<5x32xf32> to vector<1x1x5x32xf32>
    tpu.vector_store %arg4[%c0_65, %c1_66, %c0_67, %c0_68], %188 {strides = array<i32>} : memref<1x3x5x32xf32, #tpu.memory_space<vmem>>, vector<1x1x5x32xf32>,
    %c0_69 = arith.constant 0 : index
    %c2 = arith.constant 2 : index
    %c0_70 = arith.constant 0 : index
    %c0_71 = arith.constant 0 : index
    %189 = vector.load %arg4[%c0_69, %c2, %c0_70, %c0_71] : memref<1x3x5x32xf32, #tpu.memory_space<vmem>>, vector<1x1x5x32xf32>
    %190 = vector.shape_cast %189 : vector<1x1x5x32xf32> to vector<5x32xf32>
    %191 = vector.shape_cast %180 : vector<5x32xf32> to vector<1x1x5x32xf32>
    tpu.vector_store %arg4[%c0_69, %c2, %c0_70, %c0_71], %191 {strides = array<i32>} : memref<1x3x5x32xf32, #tpu.memory_space<vmem>>, vector<1x1x5x32xf32>,
    %c0_72 = arith.constant 0 : index
    %c0_73 = arith.constant 0 : index
    %c0_74 = arith.constant 0 : index
    %192 = vector.load %arg5[%c0_72, %c0_73, %c0_74] : memref<1x5x8xf32, #tpu.memory_space<vmem>>, vector<1x5x8xf32>
    %193 = vector.shape_cast %192 : vector<1x5x8xf32> to vector<5x8xf32>
    %194 = vector.shape_cast %160 : vector<5x8xf32> to vector<1x5x8xf32>
    tpu.vector_store %arg5[%c0_72, %c0_73, %c0_74], %194 {strides = array<i32>} : memref<1x5x8xf32, #tpu.memory_space<vmem>>, vector<1x5x8xf32>,
    return
  }
  func.func @transform_0(%arg0: i32) -> (i32, i32, i32) {
    %c0_i32 = arith.constant 0 : i32
    %c0_i32_0 = arith.constant 0 : i32
    %c0_i32_1 = arith.constant 0 : i32
    %c0_i32_2 = arith.constant 0 : i32
    return %c0_i32, %c0_i32_0, %c0_i32_1 : i32, i32, i32
  }
  func.func @transform_1(%arg0: i32) -> (i32, i32, i32) {
    %c0_i32 = arith.constant 0 : i32
    %c0_i32_0 = arith.constant 0 : i32
    %c0_i32_1 = arith.constant 0 : i32
    return %arg0, %c0_i32, %c0_i32_0 : i32, i32, i32
  }
  func.func @transform_2(%arg0: i32) -> (i32, i32, i32) {
    %c0_i32 = arith.constant 0 : i32
    %c0_i32_0 = arith.constant 0 : i32
    %c0_i32_1 = arith.constant 0 : i32
    return %arg0, %c0_i32, %c0_i32_0 : i32, i32, i32
  }
  func.func @transform_3(%arg0: i32) -> (i32, i32, i32, i32) {
    %c0_i32 = arith.constant 0 : i32
    %c0_i32_0 = arith.constant 0 : i32
    %c0_i32_1 = arith.constant 0 : i32
    %c0_i32_2 = arith.constant 0 : i32
    return %arg0, %c0_i32, %c0_i32_0, %c0_i32_1 : i32, i32, i32, i32
  }
  func.func @transform_4(%arg0: i32) -> (i32, i32, i32) {
    %c0_i32 = arith.constant 0 : i32
    %c0_i32_0 = arith.constant 0 : i32
    %c0_i32_1 = arith.constant 0 : i32
    return %arg0, %c0_i32, %c0_i32_0 : i32, i32, i32
  }
}

</mosaic_0001>

<llo_original>
// kernel: tpu_custom_call.1
$region0: #{tpu_custom_call.1}
  #allocation0 [shape = 'u32[]', space=smem, size = 0x4, offset = 0x4, fixed_abs, tag = 'smem constant byte address 0x4 - core index']
  #allocation1 [shape = 'u32[144,128]{1,0:T(1,128)}', space=vmem, size = 0x12000, scoped, tag = 'internal scratch']
  %s0 = inlined_call_operand.vmem [shape: f32[2,5,64], index: 0, kind: input, shape index: {}]
  %s1 = inlined_call_operand.vmem [shape: f32[2,32,8], index: 1, kind: input, shape index: {}]
  %s2 = inlined_call_operand.vmem [shape: f32[2,1,8], index: 2, kind: input, shape index: {}]
  %s3 = inlined_call_operand.vmem [shape: f32[2,3,5,32], index: 3, kind: output, shape index: {0}]
  %s4 = inlined_call_operand.vmem [shape: f32[2,5,8], index: 4, kind: output, shape index: {1}]
  %5 = xla_tuple %s3, %s4
  %s6 = sld [smem:[#allocation0]]
  $region53: #{tpu_custom_call.1} parent=0
    _
  %s8 = ssub.s32 1, %s6
  %s9 = scalar_select 0, %s8, %s6
  loop: start=0, step=1, limit=4
  $region2: #{tpu_custom_call.1} parent=0 // loop_pre_header
    _
  $region3: #{tpu_custom_call.1} parent=0 // loop_header
    %s11 = sphi 0, %s15
    %p12 = scmp.ge.s32.totalorder %s11, 4
    %s19 = sphi 0, %s19
    %s21 = sphi 0, %s19
    %s22 = sphi 0, %s21
    %s36 = sphi 0, %s22
    %s42 = sphi 0, %s44
    %s45 = sphi 0, %s42
    %s46 = sphi 0, %s45
    %s62 = sphi 0, %s46
    %s68 = sphi 0, %s70
    %s71 = sphi 0, %s68
    %s72 = sphi 0, %s71
    %s88 = sphi 0, %s72
    %s94 = sphi 0, %s96
    %s97 = sphi 0, %s94
    %s98 = sphi 0, %s97
    %s114 = sphi 0, %s98
    %s120 = sphi 0, %s122
    %s123 = sphi 0, %s120
    %s124 = sphi 0, %s123
    %s140 = sphi 0, %s124
  $region4: #{tpu_custom_call.1} parent=0 // loop_header_branch
    %14 = sbr.rel (%p12) target = $region8
  $region5: #{tpu_custom_call.1} parent=0 // loop_body
    %s16 = ssub.s32 %s11, 1
    %s17 = ssub.s32 %s11, 2
    %s18 = sadd.s32 %s11, 1
    %s20 = sadd.s32 %s19, 1
    %p23 = scmp.eq.s32.totalorder %s11, 1
    %p24 = scmp.ne.s32.totalorder %s19, %s21
    %p25 = scmp.eq.s32.totalorder %s11, 0
    %p26 = por %p24, %p25
    %p27 = scmp.ne.s32.totalorder %s19, %s21
    %p28 = scmp.eq.s32.totalorder %s16, 1
    %p29 = por %p27, %p28
    %p30 = scmp.ne.s32.totalorder %s21, %s22
    %p31 = scmp.eq.s32.totalorder %s16, 0
    %p32 = por %p30, %p31
    %p33 = scmp.ne.s32.totalorder %s21, %s22
    %p34 = scmp.eq.s32.totalorder %s17, 1
    %p35 = por %p33, %p34
    %p37 = scmp.ne.s32.totalorder %s22, %s36
    %p38 = scmp.eq.s32.totalorder %s17, 0
    %p39 = por %p37, %p38
    %s40 = ssub.s32 %s11, %s18
    %p41 = scmp.eq.s32.totalorder %s40, 0
    %s43 = sadd.s32 %s42, 1
    %s44 = scalar_select %p41, %s42, %s43
    %p47 = pneg %p41
    %p48 = scmp.eq.s32.totalorder %s11, 1
    %p49 = por %p47, %p48
    %p50 = scmp.ne.s32.totalorder %s42, %s45
    %p51 = scmp.eq.s32.totalorder %s11, 0
    %p52 = por %p50, %p51
    %p53 = scmp.ne.s32.totalorder %s42, %s45
    %p54 = scmp.eq.s32.totalorder %s16, 1
    %p55 = por %p53, %p54
    %p56 = scmp.ne.s32.totalorder %s45, %s46
    %p57 = scmp.eq.s32.totalorder %s16, 0
    %p58 = por %p56, %p57
    %p59 = scmp.ne.s32.totalorder %s45, %s46
    %p60 = scmp.eq.s32.totalorder %s17, 1
    %p61 = por %p59, %p60
    %p63 = scmp.ne.s32.totalorder %s46, %s62
    %p64 = scmp.eq.s32.totalorder %s17, 0
    %p65 = por %p63, %p64
    %s66 = ssub.s32 %s11, %s18
    %p67 = scmp.eq.s32.totalorder %s66, 0
    %s69 = sadd.s32 %s68, 1
    %s70 = scalar_select %p67, %s68, %s69
    %p73 = pneg %p67
    %p74 = scmp.eq.s32.totalorder %s11, 1
    %p75 = por %p73, %p74
    %p76 = scmp.ne.s32.totalorder %s68, %s71
    %p77 = scmp.eq.s32.totalorder %s11, 0
    %p78 = por %p76, %p77
    %p79 = scmp.ne.s32.totalorder %s68, %s71
    %p80 = scmp.eq.s32.totalorder %s16, 1
    %p81 = por %p79, %p80
    %p82 = scmp.ne.s32.totalorder %s71, %s72
    %p83 = scmp.eq.s32.totalorder %s16, 0
    %p84 = por %p82, %p83
    %p85 = scmp.ne.s32.totalorder %s71, %s72
    %p86 = scmp.eq.s32.totalorder %s17, 1
    %p87 = por %p85, %p86
    %p89 = scmp.ne.s32.totalorder %s72, %s88
    %p90 = scmp.eq.s32.totalorder %s17, 0
    %p91 = por %p89, %p90
    %s92 = ssub.s32 %s11, %s18
    %p93 = scmp.eq.s32.totalorder %s92, 0
    %s95 = sadd.s32 %s94, 1
    %s96 = scalar_select %p93, %s94, %s95
    %p99 = pneg %p93
    %p100 = scmp.eq.s32.totalorder %s11, 1
    %p101 = por %p99, %p100
    %p102 = scmp.ne.s32.totalorder %s94, %s97
    %p103 = scmp.eq.s32.totalorder %s11, 0
    %p104 = por %p102, %p103
    %p105 = scmp.ne.s32.totalorder %s94, %s97
    %p106 = scmp.eq.s32.totalorder %s16, 1
    %p107 = por %p105, %p106
    %p108 = scmp.ne.s32.totalorder %s97, %s98
    %p109 = scmp.eq.s32.totalorder %s16, 0
    %p110 = por %p108, %p109
    %p111 = scmp.ne.s32.totalorder %s97, %s98
    %p112 = scmp.eq.s32.totalorder %s17, 1
    %p113 = por %p111, %p112
    %p115 = scmp.ne.s32.totalorder %s98, %s114
    %p116 = scmp.eq.s32.totalorder %s17, 0
    %p117 = por %p115, %p116
    %s118 = ssub.s32 %s11, %s18
    %p119 = scmp.eq.s32.totalorder %s118, 0
    %s121 = sadd.s32 %s120, 1
    %s122 = scalar_select %p119, %s120, %s121
    %p125 = pneg %p119
    %p126 = scmp.eq.s32.totalorder %s11, 1
    %p127 = por %p125, %p126
    %p128 = scmp.ne.s32.totalorder %s120, %s123
    %p129 = scmp.eq.s32.totalorder %s11, 0
    %p130 = por %p128, %p129
    %p131 = scmp.ne.s32.totalorder %s120, %s123
    %p132 = scmp.eq.s32.totalorder %s16, 1
    %p133 = por %p131, %p132
    %p134 = scmp.ne.s32.totalorder %s123, %s124
    %p135 = scmp.eq.s32.totalorder %s16, 0
    %p136 = por %p134, %p135
    %p137 = scmp.ne.s32.totalorder %s123, %s124
    %p138 = scmp.eq.s32.totalorder %s17, 1
    %p139 = por %p137, %p138
    %p141 = scmp.ne.s32.totalorder %s124, %s140
    %p142 = scmp.eq.s32.totalorder %s17, 0
    %p143 = por %p141, %p142
    %p144 = scmp.le.s32.totalorder 1, %s11
    %p145 = scmp.lt.s32.totalorder %s11, 3
    %p146 = pnand %p144, %p145
    %p147 = pneg %p146
    // Predicated region
    $region9: #{tpu_custom_call.1} parent=5 // pred_check
      _
    $region10: #{tpu_custom_call.1} parent=5 // pred_check_branch
      %149 = sbr.rel (%p146) target = $region12
    $region11: #{tpu_custom_call.1} parent=5 // pred_region
      %s150 = ssub.s32 %s11, 1
      // Predicated region
      $region13: #{tpu_custom_call.1} parent=11 // pred_check
        %p151 = pneg %p32
      $region14: #{tpu_custom_call.1} parent=11 // pred_check_branch
        %153 = sbr.rel (%p151) target = $region16
      $region15: #{tpu_custom_call.1} parent=11 // pred_region
        _
      $region16: #{tpu_custom_call.1} parent=11 // pred_fallthru
        _
    $region12: #{tpu_custom_call.1} parent=5 // pred_fallthru
      _
    %p154 = scmp.lt.s32.totalorder %s11, 2
    // Predicated region
    $region17: #{tpu_custom_call.1} parent=5 // pred_check
      %p155 = pneg %p154
    $region18: #{tpu_custom_call.1} parent=5 // pred_check_branch
      %157 = sbr.rel (%p155) target = $region20
    $region19: #{tpu_custom_call.1} parent=5 // pred_region
      // Predicated region
      $region21: #{tpu_custom_call.1} parent=19 // pred_check
        %p158 = pneg %p52
      $region22: #{tpu_custom_call.1} parent=19 // pred_check_branch
        %160 = sbr.rel (%p158) target = $region24
      $region23: #{tpu_custom_call.1} parent=19 // pred_region
        %p161 = scmp.lt.s32.totalorder %s11, 1
        %s162 = scalar_select %p161, %s11, 1
        %s163 = smul.addr %s162, 4
        %s164 = smul.addr %s163, 8
        %s165 = scalar_lea.vmem %s1, %s164
      $region24: #{tpu_custom_call.1} parent=19 // pred_fallthru
        _
      // Predicated region
      $region25: #{tpu_custom_call.1} parent=19 // pred_check
        %p166 = pneg %p78
      $region26: #{tpu_custom_call.1} parent=19 // pred_check_branch
        %168 = sbr.rel (%p166) target = $region28
      $region27: #{tpu_custom_call.1} parent=19 // pred_region
        %p169 = scmp.lt.s32.totalorder %s11, 1
        %s170 = scalar_select %p169, %s11, 1
        %s171 = scalar_lea.vmem %s2, %s170
      $region28: #{tpu_custom_call.1} parent=19 // pred_fallthru
        _
    $region20: #{tpu_custom_call.1} parent=5 // pred_fallthru
      _
    %p172 = scmp.le.s32.totalorder 1, %s11
    %p173 = scmp.lt.s32.totalorder %s11, 3
    %p174 = pnand %p172, %p173
    %p175 = pneg %p174
    // Predicated region
    $region29: #{tpu_custom_call.1} parent=5 // pred_check
      _
    $region30: #{tpu_custom_call.1} parent=5 // pred_check_branch
      %177 = sbr.rel (%p174) target = $region32
    $region31: #{tpu_custom_call.1} parent=5 // pred_region
      %s178 = ssub.s32 %s11, 1
      %p179 = pneg %p32
      %p180 = pneg %p29
      %p181 = scmp.lt.s32.totalorder %s16, 1
      %s182 = scalar_select %p181, %s16, 1
      %s183 = smul.addr %s182, 4
      %s184 = smul.addr %s183, 8
      %s185 = scalar_lea.vmem %s1, %s184
      %p186 = pneg %p58
      %p187 = pneg %p55
      %p188 = scmp.lt.s32.totalorder %s16, 1
      %s189 = scalar_select %p188, %s16, 1
      %s190 = scalar_lea.vmem %s2, %s189
      %p191 = pneg %p84
      %p192 = pneg %p81
      %p193 = pneg %p110
      %p194 = pneg %p107
      %p195 = scmp.lt.s32.totalorder %s16, 1
      %s196 = scalar_select %p195, %s16, 1
      %s197 = smul.addr %s196, 3
      %s198 = smul.addr %s197, 8
      %s199 = scalar_lea.vmem %s3, %s198
      %p200 = pneg %p136
      %p201 = pneg %p133
      %p202 = scmp.lt.s32.totalorder %s16, 1
      %s203 = scalar_select %p202, %s16, 1
      %s204 = smul.addr %s203, 8
      %s205 = scalar_lea.vmem %s4, %s204
      %p206 = scmp.lt.s32.totalorder %s16, 1
      %s207 = scalar_select %p206, %s16, 1
      %s208 = smul.addr %s207, 4
      %s209 = smul.addr %s208, 8
      %s210 = scalar_lea.vmem %s1, %s209
      %p211 = scmp.lt.s32.totalorder %s16, 1
      %s212 = scalar_select %p211, %s16, 1
      %s213 = scalar_lea.vmem %s2, %s212
      %p214 = scmp.lt.s32.totalorder %s16, 1
      %s215 = scalar_select %p214, %s16, 1
      %s216 = smul.addr %s215, 3
      %s217 = smul.addr %s216, 8
      %s218 = scalar_lea.vmem %s3, %s217
      %p219 = scmp.lt.s32.totalorder %s16, 1
      %s220 = scalar_select %p219, %s16, 1
      %s221 = smul.addr %s220, 8
      %s222 = scalar_lea.vmem %s4, %s221
      %v223 = vld [vmem:[%s0] sm:$0x1f]
      %s224 = scalar_lea.vmem %s0, 8
      %v225 = vld [vmem:[%s224] sm:$0x1f]
      %v226 = vld [vmem:[%s210] sm:$0xff]
      %v227 = vld [vmem:[%s210 + $0x8] sm:$0xff]
      %v228 = vld [vmem:[%s210 + $0x10] sm:$0xff]
      %v229 = vld [vmem:[%s210 + $0x18] sm:$0xff]
      %v230 = vld [vmem:[%s213] sm:$0x1]
      %v231 = vmul.f32 %v226, %v226
      %v232 = vmul.f32 %v227, %v227
      %v233 = vmul.f32 %v228, %v228
      %v234 = vmul.f32 %v229, %v229
      %v235 = vrcp.pop %v223
      %v236 = vmul.f32 1.0, %v235
      %v237 = vlog2.pop %v223
      %v238 = vmul.f32 %v237, 0.6931472
      %240 = vrot.lane.b32.xlu0 %v238, 96
      %v241 = vpop.permute.xlu0 %240
      %vm243 = vcmask 258048
      %v244 = vsel %vm243, %v241, 0.0
      %245 = vadd.xlane.f32.xlu0 %v244
      %v246 = vpop.xlane.xlu0 %245
      %v247 = vmul.f32 %v223, %v223
      %249 = vrot.lane.b32.xlu0 %v236, 96
      %v250 = vpop.permute.xlu0 %249
      %v252 = vmul.f32 %v247, %v250
      %v253 = vsel %vm243, %v252, 0.0
      %254 = vadd.xlane.f32.xlu0 %v253
      %v255 = vpop.xlane.xlu0 %254
      %v256 = vadd.f32 %v246, 58.812065
      %v257 = vadd.f32 %v256, %v255
      %v258 = vmul.f32 %v257, 0.5
      %v259 = vsub.f32 -1.609438, %v258
      %v260 = vmul.f32 %v223, %v250
      %vm261 = vcmask 261120
      %v263 = vsel %vm261, %v260, 0
      %265 = vmatprep.subr.mxu0 0.0
      %266 = vmatpush1.msra.mxu0 %v226
      %267 = vmatprep.subr.mxu0 0.0
      %268 = vmatpush1.msra.mxu0 %v227
      %269 = vmatprep.subr.mxu0 0.0
      %270 = vmatpush1.msra.mxu0 %v228
      %271 = vmatprep.subr.mxu0 0.0
      %272 = vmatpush1.msra.mxu0 %v229
      %273 = vmatprep.subr.mxu0 0.0
      %274 = vmatpush1.msra.mxu0 0.0
      %275 = vmatprep.subr.mxu0 0.0
      %276 = vmatpush1.msra.mxu0 0.0
      %277 = vmatprep.subr.mxu0 0.0
      %278 = vmatpush1.msra.mxu0 0.0
      %279 = vmatprep.subr.mxu0 0.0
      %280 = vmatpush1.msra.mxu0 0.0
      %281 = vmatprep.subr.mxu0 0.0
      %282 = vmatpush1.msra.mxu0 0.0
      %283 = vmatprep.subr.mxu0 0.0
      %284 = vmatpush1.msra.mxu0 0.0
      %285 = vmatprep.subr.mxu0 0.0
      %286 = vmatpush1.msra.mxu0 0.0
      %287 = vmatprep.subr.mxu0 0.0
      %288 = vmatpush1.msra.mxu0 0.0
      %289 = vmatprep.subr.mxu0 0.0
      %290 = vmatpush1.msra.mxu0 0.0
      %291 = vmatprep.subr.mxu0 0.0
      %292 = vmatpush1.msra.mxu0 0.0
      %293 = vmatprep.subr.mxu0 0.0
      %294 = vmatpush1.msra.mxu0 0.0
      %295 = vmatprep.subr.mxu0 0.0
      %296 = vmatpush1.msra.mxu0 0.0
      %297 = vmatprep.subr.mxu0 0.0
      %298 = vmatpush1.msra.mxu0 0.0
      %299 = vmatprep.subr.mxu0 0.0
      %300 = vmatpush1.msra.mxu0 0.0
      %301 = vmatprep.subr.mxu0 0.0
      %302 = vmatpush1.msra.mxu0 0.0
      %303 = vmatprep.subr.mxu0 0.0
      %304 = vmatpush1.msra.mxu0 0.0
      %305 = vmatprep.subr.mxu0 0.0
      %306 = vmatpush1.msra.mxu0 0.0
      %307 = vmatprep.subr.mxu0 0.0
      %308 = vmatpush1.msra.mxu0 0.0
      %309 = vmatprep.subr.mxu0 0.0
      %310 = vmatpush1.msra.mxu0 0.0
      %311 = vmatprep.subr.mxu0 0.0
      %312 = vmatpush1.msra.mxu0 0.0
      %313 = vmatprep.subr.mxu0 0.0
      %314 = vmatpush1.msra.mxu0 0.0
      %315 = vmatprep.subr.mxu0 0.0
      %316 = vmatpush1.msra.mxu0 0.0
      %317 = vmatprep.subr.mxu0 0.0
      %318 = vmatpush1.msra.mxu0 0.0
      %319 = vmatprep.subr.mxu0 0.0
      %320 = vmatpush1.msra.mxu0 0.0
      %321 = vmatprep.subr.mxu0 0.0
      %322 = vmatpush1.msra.mxu0 0.0
      %323 = vmatprep.subr.mxu0 0.0
      %324 = vmatpush1.msra.mxu0 0.0
      %325 = vmatprep.subr.mxu0 0.0
      %326 = vmatpush1.msra.mxu0 0.0
      %327 = vmatprep.subr.mxu0 0.0
      %328 = vmatpush1.msra.mxu0 0.0
      %329 = vmatprep.mubr.f32.mxu0 0.0
      %330 = vmatmul.mubr.f32.gmra.mrb[0].mxu0 %v263
      %v331 = vpop.f32.mrb[0].mxu0
      %v332 = vadd.f32 0.0, %v331
      %v333 = vpop.f32.mrb[0].mxu0
      %334 = vdwg.mxu0
      %v335 = vsel %vm261, %v250, 0
      %337 = vmatprep.subr.mxu0 0.0
      %338 = vmatpush1.msra.mxu0 %v231
      %339 = vmatprep.subr.mxu0 0.0
      %340 = vmatpush1.msra.mxu0 %v232
      %341 = vmatprep.subr.mxu0 0.0
      %342 = vmatpush1.msra.mxu0 %v233
      %343 = vmatprep.subr.mxu0 0.0
      %344 = vmatpush1.msra.mxu0 %v234
      %345 = vmatprep.subr.mxu0 0.0
      %346 = vmatpush1.msra.mxu0 0.0
      %347 = vmatprep.subr.mxu0 0.0
      %348 = vmatpush1.msra.mxu0 0.0
      %349 = vmatprep.subr.mxu0 0.0
      %350 = vmatpush1.msra.mxu0 0.0
      %351 = vmatprep.subr.mxu0 0.0
      %352 = vmatpush1.msra.mxu0 0.0
      %353 = vmatprep.subr.mxu0 0.0
      %354 = vmatpush1.msra.mxu0 0.0
      %355 = vmatprep.subr.mxu0 0.0
      %356 = vmatpush1.msra.mxu0 0.0
      %357 = vmatprep.subr.mxu0 0.0
      %358 = vmatpush1.msra.mxu0 0.0
      %359 = vmatprep.subr.mxu0 0.0
      %360 = vmatpush1.msra.mxu0 0.0
      %361 = vmatprep.subr.mxu0 0.0
      %362 = vmatpush1.msra.mxu0 0.0
      %363 = vmatprep.subr.mxu0 0.0
      %364 = vmatpush1.msra.mxu0 0.0
      %365 = vmatprep.subr.mxu0 0.0
      %366 = vmatpush1.msra.mxu0 0.0
      %367 = vmatprep.subr.mxu0 0.0
      %368 = vmatpush1.msra.mxu0 0.0
      %369 = vmatprep.subr.mxu0 0.0
      %370 = vmatpush1.msra.mxu0 0.0
      %371 = vmatprep.subr.mxu0 0.0
      %372 = vmatpush1.msra.mxu0 0.0
      %373 = vmatprep.subr.mxu0 0.0
      %374 = vmatpush1.msra.mxu0 0.0
      %375 = vmatprep.subr.mxu0 0.0
      %376 = vmatpush1.msra.mxu0 0.0
      %377 = vmatprep.subr.mxu0 0.0
      %378 = vmatpush1.msra.mxu0 0.0
      %379 = vmatprep.subr.mxu0 0.0
      %380 = vmatpush1.msra.mxu0 0.0
      %381 = vmatprep.subr.mxu0 0.0
      %382 = vmatpush1.msra.mxu0 0.0
      %383 = vmatprep.subr.mxu0 0.0
      %384 = vmatpush1.msra.mxu0 0.0
      %385 = vmatprep.subr.mxu0 0.0
      %386 = vmatpush1.msra.mxu0 0.0
      %387 = vmatprep.subr.mxu0 0.0
      %388 = vmatpush1.msra.mxu0 0.0
      %389 = vmatprep.subr.mxu0 0.0
      %390 = vmatpush1.msra.mxu0 0.0
      %391 = vmatprep.subr.mxu0 0.0
      %392 = vmatpush1.msra.mxu0 0.0
      %393 = vmatprep.subr.mxu0 0.0
      %394 = vmatpush1.msra.mxu0 0.0
      %395 = vmatprep.subr.mxu0 0.0
      %396 = vmatpush1.msra.mxu0 0.0
      %397 = vmatprep.subr.mxu0 0.0
      %398 = vmatpush1.msra.mxu0 0.0
      %399 = vmatprep.subr.mxu0 0.0
      %400 = vmatpush1.msra.mxu0 0.0
      %401 = vmatprep.mubr.f32.mxu0 0.0
      %402 = vmatmul.mubr.f32.gmra.mrb[0].mxu0 %v335
      %v403 = vpop.f32.mrb[0].mxu0
      %v404 = vadd.f32 0.0, %v403
      %v405 = vpop.f32.mrb[0].mxu0
      %406 = vdwg.mxu0
      %v407 = vmul.f32 %v404, 0.5
      %v408 = vsub.f32 %v332, %v407
      %v409 = vadd.f32 %v408, %v259
      %vm410 = vcmask 61440
      %v411 = vsel %vm410, %v409, -inf
      %v412 = vrot.slane %v411, 4
      %v413 = vmax.f32 %v411, %v412
      %v414 = vrot.slane %v413, 2
      %v415 = vmax.f32 %v413, %v414
      %v416 = vrot.slane %v415, 1
      %v417 = vmax.f32 %v415, %v416
      %v418 = vsub.f32 %v409, %v417
      %v419 = vmul.f32 %v418, 1.442695
      %v420 = vpow.pop %v419
      %v421 = vsel %vm410, %v420, 0.0
      %v422 = vrot.slane %v421, 4
      %v423 = vadd.f32 %v421, %v422
      %v424 = vrot.slane %v423, 2
      %v425 = vadd.f32 %v423, %v424
      %v426 = vrot.slane %v425, 1
      %v427 = vadd.f32 %v425, %v426
      %v428 = vrcp.pop %v427
      %v429 = vmul.f32 1.0, %v428
      %v430 = vmul.f32 %v230, %v429
      %v432 = vlaneseq
      %v433 = vshrl.u32 %v432, 7
      %v434 = vsub.s32 0, %v433
      %v435 = vrot.slane %v430, %v434
      %v437 = vmul.f32 %v420, %v435
      %v438 = vsel %vm410, %v437, 0.0
      %439 = vadd.xlane.f32.xlu0 %v438
      %v440 = vpop.xlane.xlu0 %439
      %v441 = vadd.f32 %v440, 10.0
      %vm442 = vcmask 1044480
      %v443 = vsel %vm442, %v441, 0.0
      %v444 = vrot.slane %v443, 4
      %v445 = vadd.f32 %v443, %v444
      %v446 = vrot.slane %v445, 2
      %v447 = vadd.f32 %v445, %v446
      %v448 = vrot.slane %v447, 1
      %v449 = vadd.f32 %v447, %v448
      %v450 = vrcp.pop %v449
      %v451 = vmul.f32 1.0, %v450
      %v452 = vmul.f32 %v441, %v451
      %vm453 = vcmask 64512
      %v455 = vsel %vm453, %v437, 0
      %v458 = vsel %vm453, %v226, 0
      %v461 = vsel %vm453, %v227, 0
      %v464 = vsel %vm453, %v228, 0
      %v467 = vsel %vm453, %v229, 0
      %v470 = vsel %vm453, %v231, 0
      %v473 = vsel %vm453, %v232, 0
      %v476 = vsel %vm453, %v233, 0
      %v479 = vsel %vm453, %v234, 0
      %481 = vmatprep.subr.mxu0 0.0
      %482 = vmatpush1.xpose.msra.mxu0 %v458
      %483 = vmatprep.subr.mxu0 0.0
      %484 = vmatpush1.xpose.msra.mxu0 %v461
      %485 = vmatprep.subr.mxu0 0.0
      %486 = vmatpush1.xpose.msra.mxu0 %v464
      %487 = vmatprep.subr.mxu0 0.0
      %488 = vmatpush1.xpose.msra.mxu0 %v467
      %489 = vmatprep.subr.mxu0 0.0
      %490 = vmatpush1.xpose.msra.mxu0 %v470
      %491 = vmatprep.subr.mxu0 0.0
      %492 = vmatpush1.xpose.msra.mxu0 %v473
      %493 = vmatprep.subr.mxu0 0.0
      %494 = vmatpush1.xpose.msra.mxu0 %v476
      %495 = vmatprep.subr.mxu0 0.0
      %496 = vmatpush1.xpose.msra.mxu0 %v479
      %497 = vmatprep.subr.mxu0 0.0
      %498 = vmatpush1.xpose.msra.mxu0 0.0
      %499 = vmatprep.subr.mxu0 0.0
      %500 = vmatpush1.xpose.msra.mxu0 0.0
      %501 = vmatprep.subr.mxu0 0.0
      %502 = vmatpush1.xpose.msra.mxu0 0.0
      %503 = vmatprep.subr.mxu0 0.0
      %504 = vmatpush1.xpose.msra.mxu0 0.0
      %505 = vmatprep.subr.mxu0 0.0
      %506 = vmatpush1.xpose.msra.mxu0 0.0
      %507 = vmatprep.subr.mxu0 0.0
      %508 = vmatpush1.xpose.msra.mxu0 0.0
      %509 = vmatprep.subr.mxu0 0.0
      %510 = vmatpush1.xpose.msra.mxu0 0.0
      %511 = vmatprep.subr.mxu0 0.0
      %512 = vmatpush1.xpose.msra.mxu0 0.0
      %513 = vmatprep.subr.mxu0 0.0
      %514 = vmatpush1.xpose.msra.mxu0 0.0
      %515 = vmatprep.subr.mxu0 0.0
      %516 = vmatpush1.xpose.msra.mxu0 0.0
      %517 = vmatprep.subr.mxu0 0.0
      %518 = vmatpush1.xpose.msra.mxu0 0.0
      %519 = vmatprep.subr.mxu0 0.0
      %520 = vmatpush1.xpose.msra.mxu0 0.0
      %521 = vmatprep.subr.mxu0 0.0
      %522 = vmatpush1.xpose.msra.mxu0 0.0
      %523 = vmatprep.subr.mxu0 0.0
      %524 = vmatpush1.xpose.msra.mxu0 0.0
      %525 = vmatprep.subr.mxu0 0.0
      %526 = vmatpush1.xpose.msra.mxu0 0.0
      %527 = vmatprep.subr.mxu0 0.0
      %528 = vmatpush1.xpose.msra.mxu0 0.0
      %529 = vmatprep.subr.mxu0 0.0
      %530 = vmatpush1.xpose.msra.mxu0 0.0
      %531 = vmatprep.subr.mxu0 0.0
      %532 = vmatpush1.xpose.msra.mxu0 0.0
      %533 = vmatprep.subr.mxu0 0.0
      %534 = vmatpush1.xpose.msra.mxu0 0.0
      %535 = vmatprep.subr.mxu0 0.0
      %536 = vmatpush1.xpose.msra.mxu0 0.0
      %537 = vmatprep.subr.mxu0 0.0
      %538 = vmatpush1.xpose.msra.mxu0 0.0
      %539 = vmatprep.subr.mxu0 0.0
      %540 = vmatpush1.xpose.msra.mxu0 0.0
      %541 = vmatprep.subr.mxu0 0.0
      %542 = vmatpush1.xpose.msra.mxu0 0.0
      %543 = vmatprep.subr.mxu0 0.0
      %544 = vmatpush1.xpose.msra.mxu0 0.0
      %545 = vmatprep.mubr.f32.mxu0 0.0
      %546 = vmatmul.mubr.f32.gmra.mrb[0].mxu0 %v455
      %v547 = vpop.f32.mrb[0].mxu0
      %v548 = vadd.f32 %v225, %v547
      %v549 = vpop.f32.mrb[0].mxu0
      %550 = vdwg.mxu0
      %v551 = vrcp.pop %v441
      %v552 = vmul.f32 1.0, %v551
      %v553 = vmul.f32 %v548, %v552
      %v554 = vmul.f32 %v553, %v553
      %556 = vrot.lane.b32.xlu0 %v554, 32
      %v557 = vpop.permute.xlu0 %556
      %v559 = vsub.f32 %v553, %v557
      %v560 = vrcp.pop %v559
      %v561 = vmul.f32 1.0, %v560
      %v562 = vlog2.pop %v559
      %v563 = vmul.f32 %v562, 0.6931472
      %565 = vrot.lane.b32.xlu0 %v563, 96
      %v566 = vpop.permute.xlu0 %565
      %v568 = vsel %vm243, %v566, 0.0
      %569 = vadd.xlane.f32.xlu0 %v568
      %v570 = vpop.xlane.xlu0 %569
      %572 = vrot.lane.b32.xlu0 %v561, 96
      %v573 = vpop.permute.xlu0 %572
      %v575 = vmul.f32 %v554, %v573
      %v576 = vsel %vm243, %v575, 0.0
      %577 = vadd.xlane.f32.xlu0 %v576
      %v578 = vpop.xlane.xlu0 %577
      %v579 = vlog2.pop %v452
      %v580 = vmul.f32 %v579, 0.6931472
      %v581 = vadd.f32 %v570, 58.812065
      %v582 = vadd.f32 %v581, %v578
      %v583 = vmul.f32 %v582, 0.5
      %v584 = vsub.f32 %v580, %v583
      %v585 = vmul.f32 %v553, %v573
      %v587 = vsel %vm261, %v585, 0
      %589 = vmatprep.subr.mxu0 0.0
      %590 = vmatpush1.msra.mxu0 %v226
      %591 = vmatprep.subr.mxu0 0.0
      %592 = vmatpush1.msra.mxu0 %v227
      %593 = vmatprep.subr.mxu0 0.0
      %594 = vmatpush1.msra.mxu0 %v228
      %595 = vmatprep.subr.mxu0 0.0
      %596 = vmatpush1.msra.mxu0 %v229
      %597 = vmatprep.subr.mxu0 0.0
      %598 = vmatpush1.msra.mxu0 0.0
      %599 = vmatprep.subr.mxu0 0.0
      %600 = vmatpush1.msra.mxu0 0.0
      %601 = vmatprep.subr.mxu0 0.0
      %602 = vmatpush1.msra.mxu0 0.0
      %603 = vmatprep.subr.mxu0 0.0
      %604 = vmatpush1.msra.mxu0 0.0
      %605 = vmatprep.subr.mxu0 0.0
      %606 = vmatpush1.msra.mxu0 0.0
      %607 = vmatprep.subr.mxu0 0.0
      %608 = vmatpush1.msra.mxu0 0.0
      %609 = vmatprep.subr.mxu0 0.0
      %610 = vmatpush1.msra.mxu0 0.0
      %611 = vmatprep.subr.mxu0 0.0
      %612 = vmatpush1.msra.mxu0 0.0
      %613 = vmatprep.subr.mxu0 0.0
      %614 = vmatpush1.msra.mxu0 0.0
      %615 = vmatprep.subr.mxu0 0.0
      %616 = vmatpush1.msra.mxu0 0.0
      %617 = vmatprep.subr.mxu0 0.0
      %618 = vmatpush1.msra.mxu0 0.0
      %619 = vmatprep.subr.mxu0 0.0
      %620 = vmatpush1.msra.mxu0 0.0
      %621 = vmatprep.subr.mxu0 0.0
      %622 = vmatpush1.msra.mxu0 0.0
      %623 = vmatprep.subr.mxu0 0.0
      %624 = vmatpush1.msra.mxu0 0.0
      %625 = vmatprep.subr.mxu0 0.0
      %626 = vmatpush1.msra.mxu0 0.0
      %627 = vmatprep.subr.mxu0 0.0
      %628 = vmatpush1.msra.mxu0 0.0
      %629 = vmatprep.subr.mxu0 0.0
      %630 = vmatpush1.msra.mxu0 0.0
      %631 = vmatprep.subr.mxu0 0.0
      %632 = vmatpush1.msra.mxu0 0.0
      %633 = vmatprep.subr.mxu0 0.0
      %634 = vmatpush1.msra.mxu0 0.0
      %635 = vmatprep.subr.mxu0 0.0
      %636 = vmatpush1.msra.mxu0 0.0
      %637 = vmatprep.subr.mxu0 0.0
      %638 = vmatpush1.msra.mxu0 0.0
      %639 = vmatprep.subr.mxu0 0.0
      %640 = vmatpush1.msra.mxu0 0.0
      %641 = vmatprep.subr.mxu0 0.0
      %642 = vmatpush1.msra.mxu0 0.0
      %643 = vmatprep.subr.mxu0 0.0
      %644 = vmatpush1.msra.mxu0 0.0
      %645 = vmatprep.subr.mxu0 0.0
      %646 = vmatpush1.msra.mxu0 0.0
      %647 = vmatprep.subr.mxu0 0.0
      %648 = vmatpush1.msra.mxu0 0.0
      %649 = vmatprep.subr.mxu0 0.0
      %650 = vmatpush1.msra.mxu0 0.0
      %651 = vmatprep.subr.mxu0 0.0
      %652 = vmatpush1.msra.mxu0 0.0
      %653 = vmatprep.mubr.f32.mxu0 0.0
      %654 = vmatmul.mubr.f32.gmra.mrb[0].mxu0 %v587
      %v655 = vpop.f32.mrb[0].mxu0
      %v656 = vadd.f32 0.0, %v655
      %v657 = vpop.f32.mrb[0].mxu0
      %658 = vdwg.mxu0
      %v659 = vsel %vm261, %v573, 0
      %661 = vmatprep.subr.mxu0 0.0
      %662 = vmatpush1.msra.mxu0 %v231
      %663 = vmatprep.subr.mxu0 0.0
      %664 = vmatpush1.msra.mxu0 %v232
      %665 = vmatprep.subr.mxu0 0.0
      %666 = vmatpush1.msra.mxu0 %v233
      %667 = vmatprep.subr.mxu0 0.0
      %668 = vmatpush1.msra.mxu0 %v234
      %669 = vmatprep.subr.mxu0 0.0
      %670 = vmatpush1.msra.mxu0 0.0
      %671 = vmatprep.subr.mxu0 0.0
      %672 = vmatpush1.msra.mxu0 0.0
      %673 = vmatprep.subr.mxu0 0.0
      %674 = vmatpush1.msra.mxu0 0.0
      %675 = vmatprep.subr.mxu0 0.0
      %676 = vmatpush1.msra.mxu0 0.0
      %677 = vmatprep.subr.mxu0 0.0
      %678 = vmatpush1.msra.mxu0 0.0
      %679 = vmatprep.subr.mxu0 0.0
      %680 = vmatpush1.msra.mxu0 0.0
      %681 = vmatprep.subr.mxu0 0.0
      %682 = vmatpush1.msra.mxu0 0.0
      %683 = vmatprep.subr.mxu0 0.0
      %684 = vmatpush1.msra.mxu0 0.0
      %685 = vmatprep.subr.mxu0 0.0
      %686 = vmatpush1.msra.mxu0 0.0
      %687 = vmatprep.subr.mxu0 0.0
      %688 = vmatpush1.msra.mxu0 0.0
      %689 = vmatprep.subr.mxu0 0.0
      %690 = vmatpush1.msra.mxu0 0.0
      %691 = vmatprep.subr.mxu0 0.0
      %692 = vmatpush1.msra.mxu0 0.0
      %693 = vmatprep.subr.mxu0 0.0
      %694 = vmatpush1.msra.mxu0 0.0
      %695 = vmatprep.subr.mxu0 0.0
      %696 = vmatpush1.msra.mxu0 0.0
      %697 = vmatprep.subr.mxu0 0.0
      %698 = vmatpush1.msra.mxu0 0.0
      %699 = vmatprep.subr.mxu0 0.0
      %700 = vmatpush1.msra.mxu0 0.0
      %701 = vmatprep.subr.mxu0 0.0
      %702 = vmatpush1.msra.mxu0 0.0
      %703 = vmatprep.subr.mxu0 0.0
      %704 = vmatpush1.msra.mxu0 0.0
      %705 = vmatprep.subr.mxu0 0.0
      %706 = vmatpush1.msra.mxu0 0.0
      %707 = vmatprep.subr.mxu0 0.0
      %708 = vmatpush1.msra.mxu0 0.0
      %709 = vmatprep.subr.mxu0 0.0
      %710 = vmatpush1.msra.mxu0 0.0
      %711 = vmatprep.subr.mxu0 0.0
      %712 = vmatpush1.msra.mxu0 0.0
      %713 = vmatprep.subr.mxu0 0.0
      %714 = vmatpush1.msra.mxu0 0.0
      %715 = vmatprep.subr.mxu0 0.0
      %716 = vmatpush1.msra.mxu0 0.0
      %717 = vmatprep.subr.mxu0 0.0
      %718 = vmatpush1.msra.mxu0 0.0
      %719 = vmatprep.subr.mxu0 0.0
      %720 = vmatpush1.msra.mxu0 0.0
      %721 = vmatprep.subr.mxu0 0.0
      %722 = vmatpush1.msra.mxu0 0.0
      %723 = vmatprep.subr.mxu0 0.0
      %724 = vmatpush1.msra.mxu0 0.0
      %725 = vmatprep.mubr.f32.mxu0 0.0
      %726 = vmatmul.mubr.f32.gmra.mrb[0].mxu0 %v659
      %v727 = vpop.f32.mrb[0].mxu0
      %v728 = vadd.f32 0.0, %v727
      %v729 = vpop.f32.mrb[0].mxu0
      %730 = vdwg.mxu0
      %v731 = vmul.f32 %v728, 0.5
      %v732 = vsub.f32 %v656, %v731
      %v733 = vadd.f32 %v732, %v584
      %v734 = vsel %vm410, %v733, -inf
      %v735 = vrot.slane %v734, 4
      %v736 = vmax.f32 %v734, %v735
      %v737 = vrot.slane %v736, 2
      %v738 = vmax.f32 %v736, %v737
      %v739 = vrot.slane %v738, 1
      %v740 = vmax.f32 %v738, %v739
      %v741 = vsub.f32 %v733, %v740
      %v742 = vmul.f32 %v741, 1.442695
      %v743 = vpow.pop %v742
      %v744 = vsel %vm410, %v743, 0.0
      %v745 = vrot.slane %v744, 4
      %v746 = vadd.f32 %v744, %v745
      %v747 = vrot.slane %v746, 2
      %v748 = vadd.f32 %v746, %v747
      %v749 = vrot.slane %v748, 1
      %v750 = vadd.f32 %v748, %v749
      %v751 = vrcp.pop %v750
      %v752 = vmul.f32 1.0, %v751
      %v753 = vmul.f32 %v230, %v752
      %v755 = vlaneseq
      %v756 = vshrl.u32 %v755, 7
      %v757 = vsub.s32 0, %v756
      %v758 = vrot.slane %v753, %v757
      %v760 = vmul.f32 %v743, %v758
      %v761 = vsel %vm410, %v760, 0.0
      %762 = vadd.xlane.f32.xlu0 %v761
      %v763 = vpop.xlane.xlu0 %762
      %v764 = vadd.f32 %v763, 10.0
      %v765 = vsel %vm442, %v764, 0.0
      %v766 = vrot.slane %v765, 4
      %v767 = vadd.f32 %v765, %v766
      %v768 = vrot.slane %v767, 2
      %v769 = vadd.f32 %v767, %v768
      %v770 = vrot.slane %v769, 1
      %v771 = vadd.f32 %v769, %v770
      %v772 = vrcp.pop %v771
      %v773 = vmul.f32 1.0, %v772
      %v774 = vmul.f32 %v764, %v773
      %v776 = vsel %vm453, %v760, 0
      %778 = vmatprep.subr.mxu0 0.0
      %779 = vmatpush1.xpose.msra.mxu0 %v458
      %780 = vmatprep.subr.mxu0 0.0
      %781 = vmatpush1.xpose.msra.mxu0 %v461
      %782 = vmatprep.subr.mxu0 0.0
      %783 = vmatpush1.xpose.msra.mxu0 %v464
      %784 = vmatprep.subr.mxu0 0.0
      %785 = vmatpush1.xpose.msra.mxu0 %v467
      %786 = vmatprep.subr.mxu0 0.0
      %787 = vmatpush1.xpose.msra.mxu0 %v470
      %788 = vmatprep.subr.mxu0 0.0
      %789 = vmatpush1.xpose.msra.mxu0 %v473
      %790 = vmatprep.subr.mxu0 0.0
      %791 = vmatpush1.xpose.msra.mxu0 %v476
      %792 = vmatprep.subr.mxu0 0.0
      %793 = vmatpush1.xpose.msra.mxu0 %v479
      %794 = vmatprep.subr.mxu0 0.0
      %795 = vmatpush1.xpose.msra.mxu0 0.0
      %796 = vmatprep.subr.mxu0 0.0
      %797 = vmatpush1.xpose.msra.mxu0 0.0
      %798 = vmatprep.subr.mxu0 0.0
      %799 = vmatpush1.xpose.msra.mxu0 0.0
      %800 = vmatprep.subr.mxu0 0.0
      %801 = vmatpush1.xpose.msra.mxu0 0.0
      %802 = vmatprep.subr.mxu0 0.0
      %803 = vmatpush1.xpose.msra.mxu0 0.0
      %804 = vmatprep.subr.mxu0 0.0
      %805 = vmatpush1.xpose.msra.mxu0 0.0
      %806 = vmatprep.subr.mxu0 0.0
      %807 = vmatpush1.xpose.msra.mxu0 0.0
      %808 = vmatprep.subr.mxu0 0.0
      %809 = vmatpush1.xpose.msra.mxu0 0.0
      %810 = vmatprep.subr.mxu0 0.0
      %811 = vmatpush1.xpose.msra.mxu0 0.0
      %812 = vmatprep.subr.mxu0 0.0
      %813 = vmatpush1.xpose.msra.mxu0 0.0
      %814 = vmatprep.subr.mxu0 0.0
      %815 = vmatpush1.xpose.msra.mxu0 0.0
      %816 = vmatprep.subr.mxu0 0.0
      %817 = vmatpush1.xpose.msra.mxu0 0.0
      %818 = vmatprep.subr.mxu0 0.0
      %819 = vmatpush1.xpose.msra.mxu0 0.0
      %820 = vmatprep.subr.mxu0 0.0
      %821 = vmatpush1.xpose.msra.mxu0 0.0
      %822 = vmatprep.subr.mxu0 0.0
      %823 = vmatpush1.xpose.msra.mxu0 0.0
      %824 = vmatprep.subr.mxu0 0.0
      %825 = vmatpush1.xpose.msra.mxu0 0.0
      %826 = vmatprep.subr.mxu0 0.0
      %827 = vmatpush1.xpose.msra.mxu0 0.0
      %828 = vmatprep.subr.mxu0 0.0
      %829 = vmatpush1.xpose.msra.mxu0 0.0
      %830 = vmatprep.subr.mxu0 0.0
      %831 = vmatpush1.xpose.msra.mxu0 0.0
      %832 = vmatprep.subr.mxu0 0.0
      %833 = vmatpush1.xpose.msra.mxu0 0.0
      %834 = vmatprep.subr.mxu0 0.0
      %835 = vmatpush1.xpose.msra.mxu0 0.0
      %836 = vmatprep.subr.mxu0 0.0
      %837 = vmatpush1.xpose.msra.mxu0 0.0
      %838 = vmatprep.subr.mxu0 0.0
      %839 = vmatpush1.xpose.msra.mxu0 0.0
      %840 = vmatprep.subr.mxu0 0.0
      %841 = vmatpush1.xpose.msra.mxu0 0.0
      %842 = vmatprep.mubr.f32.mxu0 0.0
      %843 = vmatmul.mubr.f32.gmra.mrb[0].mxu0 %v776
      %v844 = vpop.f32.mrb[0].mxu0
      %v845 = vadd.f32 %v225, %v844
      %v846 = vpop.f32.mrb[0].mxu0
      %847 = vdwg.mxu0
      %v848 = vrcp.pop %v764
      %v849 = vmul.f32 1.0, %v848
      %v850 = vmul.f32 %v845, %v849
      %v851 = vmul.f32 %v850, %v850
      %853 = vrot.lane.b32.xlu0 %v851, 32
      %v854 = vpop.permute.xlu0 %853
      %v856 = vsub.f32 %v850, %v854
      %v857 = vrcp.pop %v856
      %v858 = vmul.f32 1.0, %v857
      %v859 = vlog2.pop %v856
      %v860 = vmul.f32 %v859, 0.6931472
      %862 = vrot.lane.b32.xlu0 %v860, 96
      %v863 = vpop.permute.xlu0 %862
      %v865 = vsel %vm243, %v863, 0.0
      %866 = vadd.xlane.f32.xlu0 %v865
      %v867 = vpop.xlane.xlu0 %866
      %869 = vrot.lane.b32.xlu0 %v858, 96
      %v870 = vpop.permute.xlu0 %869
      %v872 = vmul.f32 %v851, %v870
      %v873 = vsel %vm243, %v872, 0.0
      %874 = vadd.xlane.f32.xlu0 %v873
      %v875 = vpop.xlane.xlu0 %874
      %v876 = vlog2.pop %v774
      %v877 = vmul.f32 %v876, 0.6931472
      %v878 = vadd.f32 %v867, 58.812065
      %v879 = vadd.f32 %v878, %v875
      %v880 = vmul.f32 %v879, 0.5
      %v881 = vsub.f32 %v877, %v880
      %v882 = vmul.f32 %v850, %v870
      %v884 = vsel %vm261, %v882, 0
      %886 = vmatprep.subr.mxu0 0.0
      %887 = vmatpush1.msra.mxu0 %v226
      %888 = vmatprep.subr.mxu0 0.0
      %889 = vmatpush1.msra.mxu0 %v227
      %890 = vmatprep.subr.mxu0 0.0
      %891 = vmatpush1.msra.mxu0 %v228
      %892 = vmatprep.subr.mxu0 0.0
      %893 = vmatpush1.msra.mxu0 %v229
      %894 = vmatprep.subr.mxu0 0.0
      %895 = vmatpush1.msra.mxu0 0.0
      %896 = vmatprep.subr.mxu0 0.0
      %897 = vmatpush1.msra.mxu0 0.0
      %898 = vmatprep.subr.mxu0 0.0
      %899 = vmatpush1.msra.mxu0 0.0
      %900 = vmatprep.subr.mxu0 0.0
      %901 = vmatpush1.msra.mxu0 0.0
      %902 = vmatprep.subr.mxu0 0.0
      %903 = vmatpush1.msra.mxu0 0.0
      %904 = vmatprep.subr.mxu0 0.0
      %905 = vmatpush1.msra.mxu0 0.0
      %906 = vmatprep.subr.mxu0 0.0
      %907 = vmatpush1.msra.mxu0 0.0
      %908 = vmatprep.subr.mxu0 0.0
      %909 = vmatpush1.msra.mxu0 0.0
      %910 = vmatprep.subr.mxu0 0.0
      %911 = vmatpush1.msra.mxu0 0.0
      %912 = vmatprep.subr.mxu0 0.0
      %913 = vmatpush1.msra.mxu0 0.0
      %914 = vmatprep.subr.mxu0 0.0
      %915 = vmatpush1.msra.mxu0 0.0
      %916 = vmatprep.subr.mxu0 0.0
      %917 = vmatpush1.msra.mxu0 0.0
      %918 = vmatprep.subr.mxu0 0.0
      %919 = vmatpush1.msra.mxu0 0.0
      %920 = vmatprep.subr.mxu0 0.0
      %921 = vmatpush1.msra.mxu0 0.0
      %922 = vmatprep.subr.mxu0 0.0
      %923 = vmatpush1.msra.mxu0 0.0
      %924 = vmatprep.subr.mxu0 0.0
      %925 = vmatpush1.msra.mxu0 0.0
      %926 = vmatprep.subr.mxu0 0.0
      %927 = vmatpush1.msra.mxu0 0.0
      %928 = vmatprep.subr.mxu0 0.0
      %929 = vmatpush1.msra.mxu0 0.0
      %930 = vmatprep.subr.mxu0 0.0
      %931 = vmatpush1.msra.mxu0 0.0
      %932 = vmatprep.subr.mxu0 0.0
      %933 = vmatpush1.msra.mxu0 0.0
      %934 = vmatprep.subr.mxu0 0.0
      %935 = vmatpush1.msra.mxu0 0.0
      %936 = vmatprep.subr.mxu0 0.0
      %937 = vmatpush1.msra.mxu0 0.0
      %938 = vmatprep.subr.mxu0 0.0
      %939 = vmatpush1.msra.mxu0 0.0
      %940 = vmatprep.subr.mxu0 0.0
      %941 = vmatpush1.msra.mxu0 0.0
      %942 = vmatprep.subr.mxu0 0.0
      %943 = vmatpush1.msra.mxu0 0.0
      %944 = vmatprep.subr.mxu0 0.0
      %945 = vmatpush1.msra.mxu0 0.0
      %946 = vmatprep.subr.mxu0 0.0
      %947 = vmatpush1.msra.mxu0 0.0
      %948 = vmatprep.subr.mxu0 0.0
      %949 = vmatpush1.msra.mxu0 0.0
      %950 = vmatprep.mubr.f32.mxu0 0.0
      %951 = vmatmul.mubr.f32.gmra.mrb[0].mxu0 %v884
      %v952 = vpop.f32.mrb[0].mxu0
      %v953 = vadd.f32 0.0, %v952
      %v954 = vpop.f32.mrb[0].mxu0
      %955 = vdwg.mxu0
      %v956 = vsel %vm261, %v870, 0
      %958 = vmatprep.subr.mxu0 0.0
      %959 = vmatpush1.msra.mxu0 %v231
      %960 = vmatprep.subr.mxu0 0.0
      %961 = vmatpush1.msra.mxu0 %v232
      %962 = vmatprep.subr.mxu0 0.0
      %963 = vmatpush1.msra.mxu0 %v233
      %964 = vmatprep.subr.mxu0 0.0
      %965 = vmatpush1.msra.mxu0 %v234
      %966 = vmatprep.subr.mxu0 0.0
      %967 = vmatpush1.msra.mxu0 0.0
      %968 = vmatprep.subr.mxu0 0.0
      %969 = vmatpush1.msra.mxu0 0.0
      %970 = vmatprep.subr.mxu0 0.0
      %971 = vmatpush1.msra.mxu0 0.0
      %972 = vmatprep.subr.mxu0 0.0
      %973 = vmatpush1.msra.mxu0 0.0
      %974 = vmatprep.subr.mxu0 0.0
      %975 = vmatpush1.msra.mxu0 0.0
      %976 = vmatprep.subr.mxu0 0.0
      %977 = vmatpush1.msra.mxu0 0.0
      %978 = vmatprep.subr.mxu0 0.0
      %979 = vmatpush1.msra.mxu0 0.0
      %980 = vmatprep.subr.mxu0 0.0
      %981 = vmatpush1.msra.mxu0 0.0
      %982 = vmatprep.subr.mxu0 0.0
      %983 = vmatpush1.msra.mxu0 0.0
      %984 = vmatprep.subr.mxu0 0.0
      %985 = vmatpush1.msra.mxu0 0.0
      %986 = vmatprep.subr.mxu0 0.0
      %987 = vmatpush1.msra.mxu0 0.0
      %988 = vmatprep.subr.mxu0 0.0
      %989 = vmatpush1.msra.mxu0 0.0
      %990 = vmatprep.subr.mxu0 0.0
      %991 = vmatpush1.msra.mxu0 0.0
      %992 = vmatprep.subr.mxu0 0.0
      %993 = vmatpush1.msra.mxu0 0.0
      %994 = vmatprep.subr.mxu0 0.0
      %995 = vmatpush1.msra.mxu0 0.0
      %996 = vmatprep.subr.mxu0 0.0
      %997 = vmatpush1.msra.mxu0 0.0
      %998 = vmatprep.subr.mxu0 0.0
      %999 = vmatpush1.msra.mxu0 0.0
      %1000 = vmatprep.subr.mxu0 0.0
      %1001 = vmatpush1.msra.mxu0 0.0
      %1002 = vmatprep.subr.mxu0 0.0
      %1003 = vmatpush1.msra.mxu0 0.0
      %1004 = vmatprep.subr.mxu0 0.0
      %1005 = vmatpush1.msra.mxu0 0.0
      %1006 = vmatprep.subr.mxu0 0.0
      %1007 = vmatpush1.msra.mxu0 0.0
      %1008 = vmatprep.subr.mxu0 0.0
      %1009 = vmatpush1.msra.mxu0 0.0
      %1010 = vmatprep.subr.mxu0 0.0
      %1011 = vmatpush1.msra.mxu0 0.0
      %1012 = vmatprep.subr.mxu0 0.0
      %1013 = vmatpush1.msra.mxu0 0.0
      %1014 = vmatprep.subr.mxu0 0.0
      %1015 = vmatpush1.msra.mxu0 0.0
      %1016 = vmatprep.subr.mxu0 0.0
      %1017 = vmatpush1.msra.mxu0 0.0
      %1018 = vmatprep.subr.mxu0 0.0
      %1019 = vmatpush1.msra.mxu0 0.0
      %1020 = vmatprep.subr.mxu0 0.0
      %1021 = vmatpush1.msra.mxu0 0.0
      %1022 = vmatprep.mubr.f32.mxu0 0.0
      %1023 = vmatmul.mubr.f32.gmra.mrb[0].mxu0 %v956
      %v1024 = vpop.f32.mrb[0].mxu0
      %v1025 = vadd.f32 0.0, %v1024
      %v1026 = vpop.f32.mrb[0].mxu0
      %1027 = vdwg.mxu0
      %v1028 = vmul.f32 %v1025, 0.5
      %v1029 = vsub.f32 %v953, %v1028
      %v1030 = vadd.f32 %v1029, %v881
      %v1031 = vsel %vm410, %v1030, -inf
      %v1032 = vrot.slane %v1031, 4
      %v1033 = vmax.f32 %v1031, %v1032
      %v1034 = vrot.slane %v1033, 2
      %v1035 = vmax.f32 %v1033, %v1034
      %v1036 = vrot.slane %v1035, 1
      %v1037 = vmax.f32 %v1035, %v1036
      %v1038 = vsub.f32 %v1030, %v1037
      %v1039 = vmul.f32 %v1038, 1.442695
      %v1040 = vpow.pop %v1039
      %v1041 = vsel %vm410, %v1040, 0.0
      %v1042 = vrot.slane %v1041, 4
      %v1043 = vadd.f32 %v1041, %v1042
      %v1044 = vrot.slane %v1043, 2
      %v1045 = vadd.f32 %v1043, %v1044
      %v1046 = vrot.slane %v1045, 1
      %v1047 = vadd.f32 %v1045, %v1046
      %v1048 = vrcp.pop %v1047
      %v1049 = vmul.f32 1.0, %v1048
      %v1050 = vmul.f32 %v230, %v1049
      %v1052 = vlaneseq
      %v1053 = vshrl.u32 %v1052, 7
      %v1054 = vsub.s32 0, %v1053
      %v1055 = vrot.slane %v1050, %v1054
      %v1057 = vmul.f32 %v1040, %v1055
      %v1058 = vsel %vm410, %v1057, 0.0
      %1059 = vadd.xlane.f32.xlu0 %v1058
      %v1060 = vpop.xlane.xlu0 %1059
      %v1061 = vadd.f32 %v1060, 10.0
      %v1062 = vsel %vm442, %v1061, 0.0
      %v1063 = vrot.slane %v1062, 4
      %v1064 = vadd.f32 %v1062, %v1063
      %v1065 = vrot.slane %v1064, 2
      %v1066 = vadd.f32 %v1064, %v1065
      %v1067 = vrot.slane %v1066, 1
      %v1068 = vadd.f32 %v1066, %v1067
      %v1069 = vrcp.pop %v1068
      %v1070 = vmul.f32 1.0, %v1069
      %v1071 = vmul.f32 %v1061, %v1070
      %v1073 = vsel %vm453, %v1057, 0
      %1075 = vmatprep.subr.mxu0 0.0
      %1076 = vmatpush1.xpose.msra.mxu0 %v458
      %1077 = vmatprep.subr.mxu0 0.0
      %1078 = vmatpush1.xpose.msra.mxu0 %v461
      %1079 = vmatprep.subr.mxu0 0.0
      %1080 = vmatpush1.xpose.msra.mxu0 %v464
      %1081 = vmatprep.subr.mxu0 0.0
      %1082 = vmatpush1.xpose.msra.mxu0 %v467
      %1083 = vmatprep.subr.mxu0 0.0
      %1084 = vmatpush1.xpose.msra.mxu0 %v470
      %1085 = vmatprep.subr.mxu0 0.0
      %1086 = vmatpush1.xpose.msra.mxu0 %v473
      %1087 = vmatprep.subr.mxu0 0.0
      %1088 = vmatpush1.xpose.msra.mxu0 %v476
      %1089 = vmatprep.subr.mxu0 0.0
      %1090 = vmatpush1.xpose.msra.mxu0 %v479
      %1091 = vmatprep.subr.mxu0 0.0
      %1092 = vmatpush1.xpose.msra.mxu0 0.0
      %1093 = vmatprep.subr.mxu0 0.0
      %1094 = vmatpush1.xpose.msra.mxu0 0.0
      %1095 = vmatprep.subr.mxu0 0.0
      %1096 = vmatpush1.xpose.msra.mxu0 0.0
      %1097 = vmatprep.subr.mxu0 0.0
      %1098 = vmatpush1.xpose.msra.mxu0 0.0
      %1099 = vmatprep.subr.mxu0 0.0
      %1100 = vmatpush1.xpose.msra.mxu0 0.0
      %1101 = vmatprep.subr.mxu0 0.0
      %1102 = vmatpush1.xpose.msra.mxu0 0.0
      %1103 = vmatprep.subr.mxu0 0.0
      %1104 = vmatpush1.xpose.msra.mxu0 0.0
      %1105 = vmatprep.subr.mxu0 0.0
      %1106 = vmatpush1.xpose.msra.mxu0 0.0
      %1107 = vmatprep.subr.mxu0 0.0
      %1108 = vmatpush1.xpose.msra.mxu0 0.0
      %1109 = vmatprep.subr.mxu0 0.0
      %1110 = vmatpush1.xpose.msra.mxu0 0.0
      %1111 = vmatprep.subr.mxu0 0.0
      %1112 = vmatpush1.xpose.msra.mxu0 0.0
      %1113 = vmatprep.subr.mxu0 0.0
      %1114 = vmatpush1.xpose.msra.mxu0 0.0
      %1115 = vmatprep.subr.mxu0 0.0
      %1116 = vmatpush1.xpose.msra.mxu0 0.0
      %1117 = vmatprep.subr.mxu0 0.0
      %1118 = vmatpush1.xpose.msra.mxu0 0.0
      %1119 = vmatprep.subr.mxu0 0.0
      %1120 = vmatpush1.xpose.msra.mxu0 0.0
      %1121 = vmatprep.subr.mxu0 0.0
      %1122 = vmatpush1.xpose.msra.mxu0 0.0
      %1123 = vmatprep.subr.mxu0 0.0
      %1124 = vmatpush1.xpose.msra.mxu0 0.0
      %1125 = vmatprep.subr.mxu0 0.0
      %1126 = vmatpush1.xpose.msra.mxu0 0.0
      %1127 = vmatprep.subr.mxu0 0.0
      %1128 = vmatpush1.xpose.msra.mxu0 0.0
      %1129 = vmatprep.subr.mxu0 0.0
      %1130 = vmatpush1.xpose.msra.mxu0 0.0
      %1131 = vmatprep.subr.mxu0 0.0
      %1132 = vmatpush1.xpose.msra.mxu0 0.0
      %1133 = vmatprep.subr.mxu0 0.0
      %1134 = vmatpush1.xpose.msra.mxu0 0.0
      %1135 = vmatprep.subr.mxu0 0.0
      %1136 = vmatpush1.xpose.msra.mxu0 0.0
      %1137 = vmatprep.subr.mxu0 0.0
      %1138 = vmatpush1.xpose.msra.mxu0 0.0
      %1139 = vmatprep.mubr.f32.mxu0 0.0
      %1140 = vmatmul.mubr.f32.gmra.mrb[0].mxu0 %v1073
      %v1141 = vpop.f32.mrb[0].mxu0
      %v1142 = vadd.f32 %v225, %v1141
      %v1143 = vpop.f32.mrb[0].mxu0
      %1144 = vdwg.mxu0
      %v1145 = vrcp.pop %v1061
      %v1146 = vmul.f32 1.0, %v1145
      %v1147 = vmul.f32 %v1142, %v1146
      %v1148 = vmul.f32 %v1147, %v1147
      %1150 = vrot.lane.b32.xlu0 %v1148, 32
      %v1151 = vpop.permute.xlu0 %1150
      %v1153 = vsub.f32 %v1147, %v1151
      %1154 = vst.msk [vmem:[%s218] sm:$0x1f] %vm243, %v1071
      %s1155 = scalar_lea.vmem %s218, 8
      %1156 = vst.msk [vmem:[%s1155] sm:$0x1f] %vm243, %v1147
      %1158 = vrot.lane.b32.xlu0 %v1153, 96
      %v1159 = vpop.permute.xlu0 %1158
      %s1161 = scalar_lea.vmem %s218, 16
      %1162 = vst.msk [vmem:[%s1161] sm:$0x1f] %vm243, %v1159
      %1163 = vst.msk [vmem:[%s222] sm:$0x1f] %vm410, %v1057
      %p1164 = scmp.lt.s32.totalorder %s16, 1
      %s1165 = scalar_select %p1164, %s16, 1
      %s1166 = smul.addr %s1165, 3
      %s1167 = smul.addr %s1166, 8
      %s1168 = scalar_lea.vmem %s3, %s1167
      %p1169 = scmp.lt.s32.totalorder %s16, 1
      %s1170 = scalar_select %p1169, %s16, 1
      %s1171 = smul.addr %s1170, 8
      %s1172 = scalar_lea.vmem %s4, %s1171
      // Predicated region
      $region33: #{tpu_custom_call.1} parent=31 // pred_check
        %p1173 = pneg %p107
      $region34: #{tpu_custom_call.1} parent=31 // pred_check_branch
        %1175 = sbr.rel (%p1173) target = $region36
      $region35: #{tpu_custom_call.1} parent=31 // pred_region
        _
      $region36: #{tpu_custom_call.1} parent=31 // pred_fallthru
        _
      // Predicated region
      $region37: #{tpu_custom_call.1} parent=31 // pred_check
        %p1176 = pneg %p133
      $region38: #{tpu_custom_call.1} parent=31 // pred_check_branch
        %1178 = sbr.rel (%p1176) target = $region40
      $region39: #{tpu_custom_call.1} parent=31 // pred_region
        _
      $region40: #{tpu_custom_call.1} parent=31 // pred_fallthru
        _
    $region32: #{tpu_custom_call.1} parent=5 // pred_fallthru
      _
    %p1179 = scmp.le.s32.totalorder 2, %s11
    // Predicated region
    $region41: #{tpu_custom_call.1} parent=5 // pred_check
      %p1180 = pneg %p1179
    $region42: #{tpu_custom_call.1} parent=5 // pred_check_branch
      %1182 = sbr.rel (%p1180) target = $region44
    $region43: #{tpu_custom_call.1} parent=5 // pred_region
      %s1183 = ssub.s32 %s11, 2
      // Predicated region
      $region45: #{tpu_custom_call.1} parent=43 // pred_check
        %p1184 = pneg %p113
      $region46: #{tpu_custom_call.1} parent=43 // pred_check_branch
        %1186 = sbr.rel (%p1184) target = $region48
      $region47: #{tpu_custom_call.1} parent=43 // pred_region
        %p1187 = scmp.lt.s32.totalorder %s17, 1
        %s1188 = scalar_select %p1187, %s17, 1
        %s1189 = smul.addr %s1188, 3
        %s1190 = smul.addr %s1189, 8
        %s1191 = scalar_lea.vmem %s3, %s1190
      $region48: #{tpu_custom_call.1} parent=43 // pred_fallthru
        _
      // Predicated region
      $region49: #{tpu_custom_call.1} parent=43 // pred_check
        %p1192 = pneg %p139
      $region50: #{tpu_custom_call.1} parent=43 // pred_check_branch
        %1194 = sbr.rel (%p1192) target = $region52
      $region51: #{tpu_custom_call.1} parent=43 // pred_region
        %p1195 = scmp.lt.s32.totalorder %s17, 1
        %s1196 = scalar_select %p1195, %s17, 1
        %s1197 = smul.addr %s1196, 8
        %s1198 = scalar_lea.vmem %s4, %s1197
      $region52: #{tpu_custom_call.1} parent=43 // pred_fallthru
        _
    $region44: #{tpu_custom_call.1} parent=5 // pred_fallthru
      _
  $region6: #{tpu_custom_call.1} parent=0 // loop_footer
    %s15 = sadd.s32 1, %s11
  $region7: #{tpu_custom_call.1} parent=0 // loop_footer_branch
    %10 = sbr.rel target = $region3
  $region8: #{tpu_custom_call.1} parent=0 // loop_exit
    _

</llo_original>
